<compile_context>
chip_gen: v7x
topology: tpu7x:2x2x1
jax: 0.10.0
libtpu: 0.0.40
codegen_flags: <defaults>
</compile_context>

<pallas_src>
import jax
import jax.numpy as jnp
from jax.experimental import pallas as pl
from jax.experimental.pallas import tpu as pltpu

HIDDEN = 32          # MLP hidden width (fixed in the PyTorch module)
EPS = 1e-5           # nn.LayerNorm default eps


def _round_up(v, m):
    return -(-v // m) * m


def _layernorm(x, gamma, beta):
    mu = jnp.mean(x, axis=-1, keepdims=True)
    var = jnp.mean(jnp.square(x - mu), axis=-1, keepdims=True)
    return (x - mu) * jax.lax.rsqrt(var + EPS) * gamma + beta


# --------------------------------------------------------------------------- #
# Host-side parameter packing: 3 slabs instead of ~35 tiny arrays.
# --------------------------------------------------------------------------- #
def _pack_params(layer_params, matmul_dtype):
    win_chunks, wout_chunks, vec_rows, layer_meta = [], [], [], []
    row_off = [0]
    col_off = [0]

    def add_win(w):                       # w: [r, HIDDEN] -> 8-aligned row chunk
        r = int(w.shape[0])
        rpad = _round_up(r, 8)
        win_chunks.append(jnp.pad(w, ((0, rpad - r), (0, 0))).astype(matmul_dtype))
        off = row_off[0]
        row_off[0] += rpad
        return (off, r)

    max_c = HIDDEN
    for i, (w1, b1, g1, be1, w2, b2, g2, be2) in enumerate(layer_params):
        c_out = int(w2.shape[1])
        max_c = max(max_c, c_out)

        if i == 0:
            w1_slices = (add_win(w1),)                       # plain MLP input
        else:
            c_prev = int(w1.shape[0]) // 2
            # PyTorch concat order is [pooled, o]  ->  W1a = w1[:c_prev] (pooled)
            w1_slices = (add_win(w1[:c_prev]), add_win(w1[c_prev:]))

        cpad = _round_up(c_out, 128)                         # 128-aligned lane chunk
        wout_chunks.append(jnp.pad(w2, ((0, 0), (0, cpad - c_out))).astype(matmul_dtype))
        w2_slice = (col_off[0], c_out)
        col_off[0] += cpad

        vec_base = len(vec_rows)                             # b1,g1,be1,b2,g2,be2
        for v in (b1, g1, be1, b2, g2, be2):
            vec_rows.append(jnp.asarray(v, jnp.float32).reshape(-1))

        layer_meta.append(dict(c_out=c_out, w1=w1_slices, w2=w2_slice, vec=vec_base))

    vec_width = _round_up(max_c, 128)
    vec_slab = jnp.stack([jnp.pad(v, (0, vec_width - v.shape[0])) for v in vec_rows])
    win_slab = jnp.concatenate(win_chunks, axis=0)
    wout_slab = jnp.concatenate(wout_chunks, axis=1)
    return win_slab, wout_slab, vec_slab, layer_meta


# --------------------------------------------------------------------------- #
# The fused kernel: all SubGraphLayers + terminal node max-pool.
# --------------------------------------------------------------------------- #
def _make_kernel(layer_meta, n, bt, c_pad, matmul_dtype):
    m = bt * n
    H = HIDDEN
    cdt = matmul_dtype

    def kernel(x_ref, win_ref, wout_ref, vec_ref, y_ref):
        def vec(r, w):                              # static [1, w] f32 slice
            return vec_ref[r:r + 1, 0:w]

        def win(sl):                                # static [r, H] weight slice
            off, r = sl
            return win_ref[off:off + r, :]

        def mlp_tail(h, meta):
            """LN+ReLU on hidden, linear2, LN+ReLU -> o [m, c_out]."""
            c, vb = meta['c_out'], meta['vec']
            h = jnp.maximum(_layernorm(h, vec(vb + 1, H), vec(vb + 2, H)), 0.0)
            w2 = wout_ref[:, meta['w2'][0]:meta['w2'][0] + c]
            o = (jnp.dot(h.astype(cdt), w2, preferred_element_type=jnp.float32)
                 + vec(vb + 3, c))
            return jnp.maximum(_layernorm(o, vec(vb + 4, c), vec(vb + 5, c)), 0.0)

        # ---- layer 0: plain MLP on raw node features -------------------------
        meta0 = layer_meta[0]
        x = x_ref[...]                                              # [m, c0] f32
        h = (jnp.dot(x.astype(cdt), win(meta0['w1'][0]),
                     preferred_element_type=jnp.float32) + vec(meta0['vec'], H))
        o = mlp_tail(h, meta0)                                      # [m, c0]
        pooled = jnp.max(o.reshape(bt, n, meta0['c_out']), axis=1)  # [bt, c0]

        # ---- layers 1..L-1: concat([pooled, o]) folded into split W1 ---------
        for meta in layer_meta[1:]:
            # pooled-branch matmul on UN-broadcast rows; broadcast only [bt, H].
            ph = jnp.dot(pooled.astype(cdt), win(meta['w1'][0]),
                         preferred_element_type=jnp.float32)        # [bt, H]
            ph = jnp.broadcast_to(ph[:, None, :], (bt, n, H)).reshape(m, H)
            h = (ph
                 + jnp.dot(o.astype(cdt), win(meta['w1'][1]),
                           preferred_element_type=jnp.float32)
                 + vec(meta['vec'], H))
            o = mlp_tail(h, meta)                                   # [m, c]
            pooled = jnp.max(o.reshape(bt, n, meta['c_out']), axis=1)  # [bt, c]

        # ---- terminal pool: max_n(concat([pooled_bc, o])) == [pooled, pooled] --
        out = jnp.concatenate([pooled, pooled], axis=-1)            # [bt, 2*c_last]
        pad = c_pad - out.shape[-1]
        if pad:
            out = jnp.concatenate([out, jnp.zeros((bt, pad), jnp.float32)], axis=-1)
        y_ref[...] = out                                            # single lane-dense store

    return kernel


# --------------------------------------------------------------------------- #
# Batch tiling: VMEM-budget driven, (8,128)-legal, >=2 steps when B allows it.
# --------------------------------------------------------------------------- #
def _pick_batch_tile(batch, n, c_max):
    if batch <= 8:
        return batch
    bytes_per_poly = 8 * n * max(c_max, 128) * 4        # generous f32 live-activation est.
    vmem_cap = max(8, (12 << 20) // bytes_per_poly)     # stay under v5e's 16 MiB default
    target = max(8, -(-1024 // n))                      # aim ~1024 activation rows / step
    want = int(min(batch, vmem_cap, target))
    if batch >= 16:
        want = min(want, batch // 2)                    # >=2 steps -> v7x 2-TC sharding
    for bt in range(want, 7, -1):                       # divisor of B, multiple of 8
        if batch % bt == 0 and bt % 8 == 0:
            return bt
    return batch


def subgraph_forward(x, layer_params, *, matmul_dtype=jnp.bfloat16):
    """x: [B, n, v_len] -> [B, v_len * 2**len(layer_params)]  (float32)."""
    B, n, c0 = x.shape
    L = len(layer_params)
    c_final = c0 * 2 ** L
    c_last = c_final // 2
    c_pad = _round_up(c_final, 128)          # lane-dense, unmasked output stores

    win_slab, wout_slab, vec_slab, layer_meta = _pack_params(layer_params, matmul_dtype)

    bt = _pick_batch_tile(B, n, c_last)
    if bt != B and (bt * n) % 8 != 0:
        bt = B          # TODO(synk): ragged / odd-n polylines need masked pooling + padding
    grid = (B // bt,)
    m = bt * n

    x2d = x.reshape(B * n, c0)               # wrapper-side layout plumbing (no in-kernel reshape)

    # VMEM budget: double-buffered in/out blocks + resident param slabs + live activations.
    param_bytes = sum(int(a.size) * a.dtype.itemsize
                      for a in (win_slab, wout_slab, vec_slab))
    est = (2 * m * c0 * 4 + 2 * bt * c_pad * 4 + 2 * param_bytes
           + 8 * m * max(c_last, HIDDEN) * 4 + (1 << 20))
    vmem_limit = int(min(max(2 * est, 16 << 20), 32 << 20))

    def full_spec(a):
        nd = a.ndim
        return pl.BlockSpec(a.shape, lambda i, _nd=nd: (0,) * _nd)

    out_padded = pl.pallas_call(
        _make_kernel(layer_meta, n, bt, c_pad, matmul_dtype),
        out_shape=jax.ShapeDtypeStruct((B, c_pad), jnp.float32),
        grid=grid,
        in_specs=[pl.BlockSpec((m, c0), lambda i: (i, 0)),
                  full_spec(win_slab), full_spec(wout_slab), full_spec(vec_slab)],
        out_specs=pl.BlockSpec((bt, c_pad), lambda i: (i, 0)),
        compiler_params=pltpu.CompilerParams(
            dimension_semantics=("parallel",),        # batch tiles are independent
            vmem_limit_bytes=vmem_limit),
    )(x2d, win_slab, wout_slab, vec_slab)

    return out_padded[:, :c_final]


# ---------------- parameter construction (deterministic, synthetic) ----------
def xavier_uniform(key, shape):
    fan_in, fan_out = shape
    bound = (6.0 / (fan_in + fan_out)) ** 0.5
    return jax.random.uniform(key, shape, jnp.float32, -bound, bound)


def make_layer_params(key, c_in):
    k1, k2 = jax.random.split(key)
    w1 = xavier_uniform(k1, (c_in, HIDDEN))
    b1 = jnp.full((1, HIDDEN), 0.01, jnp.float32)
    g1 = jnp.ones((1, HIDDEN), jnp.float32)
    be1 = jnp.zeros((1, HIDDEN), jnp.float32)
    w2 = xavier_uniform(k2, (HIDDEN, c_in))
    b2 = jnp.full((1, c_in), 0.01, jnp.float32)
    g2 = jnp.ones((1, c_in), jnp.float32)
    be2 = jnp.zeros((1, c_in), jnp.float32)
    return (w1, b1, g1, be1, w2, b2, g2, be2)


# ---------------- pure-JAX reference (follows the PyTorch module exactly) ----
def ref_forward(x, layer_params, matmul_dtype=jnp.float32):
    def dot(a, w):
        return jnp.dot(a.astype(matmul_dtype), w.astype(matmul_dtype),
                       preferred_element_type=jnp.float32)
    for (w1, b1, g1, be1, w2, b2, g2, be2) in layer_params:
        h = jnp.maximum(_layernorm(dot(x, w1) + b1, g1, be1), 0.0)
        o = jnp.maximum(_layernorm(dot(h, w2) + b2, g2, be2), 0.0)
        pooled = jnp.broadcast_to(jnp.max(o, axis=1, keepdims=True), o.shape)
        x = jnp.concatenate([pooled, o], axis=-1)
    return jnp.max(x, axis=1)


if __name__ == "__main__":
    B, n, v_len, layers_number = 2, 8, 4, 4
    key = jax.random.PRNGKey(0)
    kx, *klayers = jax.random.split(key, 1 + layers_number)

    x = jax.random.normal(kx, (B, n, v_len), jnp.float32)
    layer_params = [make_layer_params(klayers[i], v_len * 2 ** i)
                    for i in range(layers_number)]

    c_final = v_len * 2 ** layers_number

    # Exact-math path (f32 MXU operands): tight check of the fused-kernel algebra.
    out_f32 = jax.block_until_ready(
        subgraph_forward(x, layer_params, matmul_dtype=jnp.float32))
    ref_f32 = ref_forward(x, layer_params, matmul_dtype=jnp.float32)
    assert out_f32.shape == (B, c_final), out_f32.shape
    assert jnp.allclose(out_f32, ref_f32, atol=2e-4, rtol=2e-4), \
        float(jnp.max(jnp.abs(out_f32 - ref_f32)))

    # Deployment path (bf16 MXU operands, f32 accumulation): v6e/v7x fast path.
    out_bf16 = jax.block_until_ready(
        subgraph_forward(x, layer_params, matmul_dtype=jnp.bfloat16))
    ref_bf16 = ref_forward(x, layer_params, matmul_dtype=jnp.bfloat16)
    assert out_bf16.shape == (B, c_final), out_bf16.shape
    assert jnp.allclose(out_bf16, ref_bf16, atol=5e-3, rtol=5e-3), \
        float(jnp.max(jnp.abs(out_bf16 - ref_bf16)))

    print("KERNEL_OK")
</pallas_src>

<mosaic_0001>
module attributes {stable_mosaic.version = 11 : i64} {
  func.func @kernel(%arg0: i32, %arg1: memref<16x4xf32, #tpu.memory_space<vmem>>, %arg2: memref<72x32xf32, #tpu.memory_space<vmem>>, %arg3: memref<32x512xf32, #tpu.memory_space<vmem>>, %arg4: memref<24x128xf32, #tpu.memory_space<vmem>>, %arg5: memref<2x128xf32, #tpu.memory_space<vmem>>) attributes {dimension_semantics = [#tpu.dimension_semantics<parallel>], iteration_bounds = array<i64: 1>, scalar_prefetch = 0 : i64, scratch_operands = 0 : i64, tpu.core_type = #tpu.core_type<tc>, window_params = [{transform_indices = @transform_0, window_bounds = array<i64: 16, 4>}, {pipeline_mode = #tpu.pipeline_mode<synchronous>, transform_indices = @transform_1, window_bounds = array<i64: 72, 32>}, {pipeline_mode = #tpu.pipeline_mode<synchronous>, transform_indices = @transform_2, window_bounds = array<i64: 32, 512>}, {pipeline_mode = #tpu.pipeline_mode<synchronous>, transform_indices = @transform_3, window_bounds = array<i64: 24, 128>}, {transform_indices = @transform_4, window_bounds = array<i64: 2, 128>}]} {
    %c0 = arith.constant 0 : index
    %c0_0 = arith.constant 0 : index
    %0 = vector.load %arg1[%c0, %c0_0] : memref<16x4xf32, #tpu.memory_space<vmem>>, vector<16x4xf32>
    %c0_1 = arith.constant 0 : index
    %c0_2 = arith.constant 0 : index
    %1 = vector.load %arg2[%c0_1, %c0_2] : memref<72x32xf32, #tpu.memory_space<vmem>>, vector<4x32xf32>
    %cst = arith.constant dense<0.000000e+00> : vector<16x32xf32>
    %2 = tpu.matmul %0, %1, %cst {dimension_numbers = #tpu.dot_dimension_numbers<[1], [0], [0], [1], [0, 0, 1, 1], [], []>} : vector<16x4xf32>, vector<4x32xf32>, vector<16x32xf32> -> vector<16x32xf32>
    %c0_3 = arith.constant 0 : index
    %c0_4 = arith.constant 0 : index
    %3 = vector.load %arg4[%c0_3, %c0_4] : memref<24x128xf32, #tpu.memory_space<vmem>>, vector<1x32xf32>
    %4 = vector.broadcast %3 : vector<1x32xf32> to vector<16x32xf32>
    %5 = arith.addf %2, %4 : vector<16x32xf32>
    %c1 = arith.constant 1 : index
    %c0_5 = arith.constant 0 : index
    %6 = vector.load %arg4[%c1, %c0_5] : memref<24x128xf32, #tpu.memory_space<vmem>>, vector<1x32xf32>
    %c2 = arith.constant 2 : index
    %c0_6 = arith.constant 0 : index
    %7 = vector.load %arg4[%c2, %c0_6] : memref<24x128xf32, #tpu.memory_space<vmem>>, vector<1x32xf32>
    %cst_7 = arith.constant dense<0.000000e+00> : vector<16xf32>
    %8 = vector.multi_reduction <add>, %5, %cst_7 [1] : vector<16x32xf32> to vector<16xf32>
    %9 = vector.shape_cast %8 : vector<16xf32> to vector<16x1xf32>
    %cst_8 = arith.constant 3.200000e+01 : f32
    %10 = vector.broadcast %cst_8 : f32 to vector<16x1xf32>
    %11 = arith.divf %9, %10 : vector<16x1xf32>
    %12 = vector.broadcast %11 : vector<16x1xf32> to vector<16x32xf32>
    %13 = arith.subf %5, %12 : vector<16x32xf32>
    %14 = arith.mulf %13, %13 : vector<16x32xf32>
    %cst_9 = arith.constant dense<0.000000e+00> : vector<16xf32>
    %15 = vector.multi_reduction <add>, %14, %cst_9 [1] : vector<16x32xf32> to vector<16xf32>
    %16 = vector.shape_cast %15 : vector<16xf32> to vector<16x1xf32>
    %cst_10 = arith.constant 3.200000e+01 : f32
    %17 = vector.broadcast %cst_10 : f32 to vector<16x1xf32>
    %18 = arith.divf %16, %17 : vector<16x1xf32>
    %19 = vector.broadcast %11 : vector<16x1xf32> to vector<16x32xf32>
    %20 = arith.subf %5, %19 : vector<16x32xf32>
    %cst_11 = arith.constant 9.99999974E-6 : f32
    %21 = vector.broadcast %cst_11 : f32 to vector<16x1xf32>
    %22 = arith.addf %18, %21 : vector<16x1xf32>
    %23 = math.rsqrt %22 : vector<16x1xf32>
    %24 = vector.broadcast %23 : vector<16x1xf32> to vector<16x32xf32>
    %25 = arith.mulf %20, %24 : vector<16x32xf32>
    %26 = vector.broadcast %6 : vector<1x32xf32> to vector<16x32xf32>
    %27 = arith.mulf %25, %26 : vector<16x32xf32>
    %28 = vector.broadcast %7 : vector<1x32xf32> to vector<16x32xf32>
    %29 = arith.addf %27, %28 : vector<16x32xf32>
    %cst_12 = arith.constant 0.000000e+00 : f32
    %30 = vector.broadcast %cst_12 : f32 to vector<16x32xf32>
    %31 = arith.maximumf %29, %30 : vector<16x32xf32>
    %c0_13 = arith.constant 0 : index
    %c0_14 = arith.constant 0 : index
    %32 = vector.load %arg3[%c0_13, %c0_14] : memref<32x512xf32, #tpu.memory_space<vmem>>, vector<32x4xf32>
    %cst_15 = arith.constant dense<0.000000e+00> : vector<16x4xf32>
    %33 = tpu.matmul %31, %32, %cst_15 {dimension_numbers = #tpu.dot_dimension_numbers<[1], [0], [0], [1], [0, 0, 1, 1], [], []>} : vector<16x32xf32>, vector<32x4xf32>, vector<16x4xf32> -> vector<16x4xf32>
    %c3 = arith.constant 3 : index
    %c0_16 = arith.constant 0 : index
    %34 = vector.load %arg4[%c3, %c0_16] : memref<24x128xf32, #tpu.memory_space<vmem>>, vector<1x4xf32>
    %35 = vector.broadcast %34 : vector<1x4xf32> to vector<16x4xf32>
    %36 = arith.addf %33, %35 : vector<16x4xf32>
    %c4 = arith.constant 4 : index
    %c0_17 = arith.constant 0 : index
    %37 = vector.load %arg4[%c4, %c0_17] : memref<24x128xf32, #tpu.memory_space<vmem>>, vector<1x4xf32>
    %c5 = arith.constant 5 : index
    %c0_18 = arith.constant 0 : index
    %38 = vector.load %arg4[%c5, %c0_18] : memref<24x128xf32, #tpu.memory_space<vmem>>, vector<1x4xf32>
    %cst_19 = arith.constant dense<0.000000e+00> : vector<16xf32>
    %39 = vector.multi_reduction <add>, %36, %cst_19 [1] : vector<16x4xf32> to vector<16xf32>
    %40 = vector.shape_cast %39 : vector<16xf32> to vector<16x1xf32>
    %cst_20 = arith.constant 4.000000e+00 : f32
    %41 = vector.broadcast %cst_20 : f32 to vector<16x1xf32>
    %42 = arith.divf %40, %41 : vector<16x1xf32>
    %43 = vector.broadcast %42 : vector<16x1xf32> to vector<16x4xf32>
    %44 = arith.subf %36, %43 : vector<16x4xf32>
    %45 = arith.mulf %44, %44 : vector<16x4xf32>
    %cst_21 = arith.constant dense<0.000000e+00> : vector<16xf32>
    %46 = vector.multi_reduction <add>, %45, %cst_21 [1] : vector<16x4xf32> to vector<16xf32>
    %47 = vector.shape_cast %46 : vector<16xf32> to vector<16x1xf32>
    %cst_22 = arith.constant 4.000000e+00 : f32
    %48 = vector.broadcast %cst_22 : f32 to vector<16x1xf32>
    %49 = arith.divf %47, %48 : vector<16x1xf32>
    %50 = vector.broadcast %42 : vector<16x1xf32> to vector<16x4xf32>
    %51 = arith.subf %36, %50 : vector<16x4xf32>
    %cst_23 = arith.constant 9.99999974E-6 : f32
    %52 = vector.broadcast %cst_23 : f32 to vector<16x1xf32>
    %53 = arith.addf %49, %52 : vector<16x1xf32>
    %54 = math.rsqrt %53 : vector<16x1xf32>
    %55 = vector.broadcast %54 : vector<16x1xf32> to vector<16x4xf32>
    %56 = arith.mulf %51, %55 : vector<16x4xf32>
    %57 = vector.broadcast %37 : vector<1x4xf32> to vector<16x4xf32>
    %58 = arith.mulf %56, %57 : vector<16x4xf32>
    %59 = vector.broadcast %38 : vector<1x4xf32> to vector<16x4xf32>
    %60 = arith.addf %58, %59 : vector<16x4xf32>
    %cst_24 = arith.constant 0.000000e+00 : f32
    %61 = vector.broadcast %cst_24 : f32 to vector<16x4xf32>
    %62 = arith.maximumf %60, %61 : vector<16x4xf32>
    %63 = vector.shape_cast %62 : vector<16x4xf32> to vector<2x8x4xf32>
    %cst_25 = arith.constant dense<0xFF800000> : vector<2x4xf32>
    %64 = vector.multi_reduction <maximumf>, %63, %cst_25 [1] : vector<2x8x4xf32> to vector<2x4xf32>
    %c8 = arith.constant 8 : index
    %c0_26 = arith.constant 0 : index
    %65 = vector.load %arg2[%c8, %c0_26] : memref<72x32xf32, #tpu.memory_space<vmem>>, vector<4x32xf32>
    %cst_27 = arith.constant dense<0.000000e+00> : vector<2x32xf32>
    %66 = tpu.matmul %64, %65, %cst_27 {dimension_numbers = #tpu.dot_dimension_numbers<[1], [0], [0], [1], [0, 0, 1, 1], [], []>} : vector<2x4xf32>, vector<4x32xf32>, vector<2x32xf32> -> vector<2x32xf32>
    %67 = vector.shape_cast %66 : vector<2x32xf32> to vector<2x1x32xf32>
    %68 = vector.shape_cast %67 : vector<2x1x32xf32> to vector<2x1x32xf32>
    %69 = vector.broadcast %68 : vector<2x1x32xf32> to vector<2x8x32xf32>
    %70 = vector.shape_cast %69 : vector<2x8x32xf32> to vector<16x32xf32>
    %c16 = arith.constant 16 : index
    %c0_28 = arith.constant 0 : index
    %71 = vector.load %arg2[%c16, %c0_28] : memref<72x32xf32, #tpu.memory_space<vmem>>, vector<4x32xf32>
    %cst_29 = arith.constant dense<0.000000e+00> : vector<16x32xf32>
    %72 = tpu.matmul %62, %71, %cst_29 {dimension_numbers = #tpu.dot_dimension_numbers<[1], [0], [0], [1], [0, 0, 1, 1], [], []>} : vector<16x4xf32>, vector<4x32xf32>, vector<16x32xf32> -> vector<16x32xf32>
    %73 = arith.addf %70, %72 : vector<16x32xf32>
    %c6 = arith.constant 6 : index
    %c0_30 = arith.constant 0 : index
    %74 = vector.load %arg4[%c6, %c0_30] : memref<24x128xf32, #tpu.memory_space<vmem>>, vector<1x32xf32>
    %75 = vector.broadcast %74 : vector<1x32xf32> to vector<16x32xf32>
    %76 = arith.addf %73, %75 : vector<16x32xf32>
    %c7 = arith.constant 7 : index
    %c0_31 = arith.constant 0 : index
    %77 = vector.load %arg4[%c7, %c0_31] : memref<24x128xf32, #tpu.memory_space<vmem>>, vector<1x32xf32>
    %c8_32 = arith.constant 8 : index
    %c0_33 = arith.constant 0 : index
    %78 = vector.load %arg4[%c8_32, %c0_33] : memref<24x128xf32, #tpu.memory_space<vmem>>, vector<1x32xf32>
    %cst_34 = arith.constant dense<0.000000e+00> : vector<16xf32>
    %79 = vector.multi_reduction <add>, %76, %cst_34 [1] : vector<16x32xf32> to vector<16xf32>
    %80 = vector.shape_cast %79 : vector<16xf32> to vector<16x1xf32>
    %cst_35 = arith.constant 3.200000e+01 : f32
    %81 = vector.broadcast %cst_35 : f32 to vector<16x1xf32>
    %82 = arith.divf %80, %81 : vector<16x1xf32>
    %83 = vector.broadcast %82 : vector<16x1xf32> to vector<16x32xf32>
    %84 = arith.subf %76, %83 : vector<16x32xf32>
    %85 = arith.mulf %84, %84 : vector<16x32xf32>
    %cst_36 = arith.constant dense<0.000000e+00> : vector<16xf32>
    %86 = vector.multi_reduction <add>, %85, %cst_36 [1] : vector<16x32xf32> to vector<16xf32>
    %87 = vector.shape_cast %86 : vector<16xf32> to vector<16x1xf32>
    %cst_37 = arith.constant 3.200000e+01 : f32
    %88 = vector.broadcast %cst_37 : f32 to vector<16x1xf32>
    %89 = arith.divf %87, %88 : vector<16x1xf32>
    %90 = vector.broadcast %82 : vector<16x1xf32> to vector<16x32xf32>
    %91 = arith.subf %76, %90 : vector<16x32xf32>
    %cst_38 = arith.constant 9.99999974E-6 : f32
    %92 = vector.broadcast %cst_38 : f32 to vector<16x1xf32>
    %93 = arith.addf %89, %92 : vector<16x1xf32>
    %94 = math.rsqrt %93 : vector<16x1xf32>
    %95 = vector.broadcast %94 : vector<16x1xf32> to vector<16x32xf32>
    %96 = arith.mulf %91, %95 : vector<16x32xf32>
    %97 = vector.broadcast %77 : vector<1x32xf32> to vector<16x32xf32>
    %98 = arith.mulf %96, %97 : vector<16x32xf32>
    %99 = vector.broadcast %78 : vector<1x32xf32> to vector<16x32xf32>
    %100 = arith.addf %98, %99 : vector<16x32xf32>
    %cst_39 = arith.constant 0.000000e+00 : f32
    %101 = vector.broadcast %cst_39 : f32 to vector<16x32xf32>
    %102 = arith.maximumf %100, %101 : vector<16x32xf32>
    %c0_40 = arith.constant 0 : index
    %c128 = arith.constant 128 : index
    %103 = vector.load %arg3[%c0_40, %c128] : memref<32x512xf32, #tpu.memory_space<vmem>>, vector<32x8xf32>
    %cst_41 = arith.constant dense<0.000000e+00> : vector<16x8xf32>
    %104 = tpu.matmul %102, %103, %cst_41 {dimension_numbers = #tpu.dot_dimension_numbers<[1], [0], [0], [1], [0, 0, 1, 1], [], []>} : vector<16x32xf32>, vector<32x8xf32>, vector<16x8xf32> -> vector<16x8xf32>
    %c9 = arith.constant 9 : index
    %c0_42 = arith.constant 0 : index
    %105 = vector.load %arg4[%c9, %c0_42] : memref<24x128xf32, #tpu.memory_space<vmem>>, vector<1x8xf32>
    %106 = vector.broadcast %105 : vector<1x8xf32> to vector<16x8xf32>
    %107 = arith.addf %104, %106 : vector<16x8xf32>
    %c10 = arith.constant 10 : index
    %c0_43 = arith.constant 0 : index
    %108 = vector.load %arg4[%c10, %c0_43] : memref<24x128xf32, #tpu.memory_space<vmem>>, vector<1x8xf32>
    %c11 = arith.constant 11 : index
    %c0_44 = arith.constant 0 : index
    %109 = vector.load %arg4[%c11, %c0_44] : memref<24x128xf32, #tpu.memory_space<vmem>>, vector<1x8xf32>
    %cst_45 = arith.constant dense<0.000000e+00> : vector<16xf32>
    %110 = vector.multi_reduction <add>, %107, %cst_45 [1] : vector<16x8xf32> to vector<16xf32>
    %111 = vector.shape_cast %110 : vector<16xf32> to vector<16x1xf32>
    %cst_46 = arith.constant 8.000000e+00 : f32
    %112 = vector.broadcast %cst_46 : f32 to vector<16x1xf32>
    %113 = arith.divf %111, %112 : vector<16x1xf32>
    %114 = vector.broadcast %113 : vector<16x1xf32> to vector<16x8xf32>
    %115 = arith.subf %107, %114 : vector<16x8xf32>
    %116 = arith.mulf %115, %115 : vector<16x8xf32>
    %cst_47 = arith.constant dense<0.000000e+00> : vector<16xf32>
    %117 = vector.multi_reduction <add>, %116, %cst_47 [1] : vector<16x8xf32> to vector<16xf32>
    %118 = vector.shape_cast %117 : vector<16xf32> to vector<16x1xf32>
    %cst_48 = arith.constant 8.000000e+00 : f32
    %119 = vector.broadcast %cst_48 : f32 to vector<16x1xf32>
    %120 = arith.divf %118, %119 : vector<16x1xf32>
    %121 = vector.broadcast %113 : vector<16x1xf32> to vector<16x8xf32>
    %122 = arith.subf %107, %121 : vector<16x8xf32>
    %cst_49 = arith.constant 9.99999974E-6 : f32
    %123 = vector.broadcast %cst_49 : f32 to vector<16x1xf32>
    %124 = arith.addf %120, %123 : vector<16x1xf32>
    %125 = math.rsqrt %124 : vector<16x1xf32>
    %126 = vector.broadcast %125 : vector<16x1xf32> to vector<16x8xf32>
    %127 = arith.mulf %122, %126 : vector<16x8xf32>
    %128 = vector.broadcast %108 : vector<1x8xf32> to vector<16x8xf32>
    %129 = arith.mulf %127, %128 : vector<16x8xf32>
    %130 = vector.broadcast %109 : vector<1x8xf32> to vector<16x8xf32>
    %131 = arith.addf %129, %130 : vector<16x8xf32>
    %cst_50 = arith.constant 0.000000e+00 : f32
    %132 = vector.broadcast %cst_50 : f32 to vector<16x8xf32>
    %133 = arith.maximumf %131, %132 : vector<16x8xf32>
    %134 = vector.shape_cast %133 : vector<16x8xf32> to vector<2x8x8xf32>
    %cst_51 = arith.constant dense<0xFF800000> : vector<2x8xf32>
    %135 = vector.multi_reduction <maximumf>, %134, %cst_51 [1] : vector<2x8x8xf32> to vector<2x8xf32>
    %c24 = arith.constant 24 : index
    %c0_52 = arith.constant 0 : index
    %136 = vector.load %arg2[%c24, %c0_52] : memref<72x32xf32, #tpu.memory_space<vmem>>, vector<8x32xf32>
    %cst_53 = arith.constant dense<0.000000e+00> : vector<2x32xf32>
    %137 = tpu.matmul %135, %136, %cst_53 {dimension_numbers = #tpu.dot_dimension_numbers<[1], [0], [0], [1], [0, 0, 1, 1], [], []>} : vector<2x8xf32>, vector<8x32xf32>, vector<2x32xf32> -> vector<2x32xf32>
    %138 = vector.shape_cast %137 : vector<2x32xf32> to vector<2x1x32xf32>
    %139 = vector.shape_cast %138 : vector<2x1x32xf32> to vector<2x1x32xf32>
    %140 = vector.broadcast %139 : vector<2x1x32xf32> to vector<2x8x32xf32>
    %141 = vector.shape_cast %140 : vector<2x8x32xf32> to vector<16x32xf32>
    %c32 = arith.constant 32 : index
    %c0_54 = arith.constant 0 : index
    %142 = vector.load %arg2[%c32, %c0_54] : memref<72x32xf32, #tpu.memory_space<vmem>>, vector<8x32xf32>
    %cst_55 = arith.constant dense<0.000000e+00> : vector<16x32xf32>
    %143 = tpu.matmul %133, %142, %cst_55 {dimension_numbers = #tpu.dot_dimension_numbers<[1], [0], [0], [1], [0, 0, 1, 1], [], []>} : vector<16x8xf32>, vector<8x32xf32>, vector<16x32xf32> -> vector<16x32xf32>
    %144 = arith.addf %141, %143 : vector<16x32xf32>
    %c12 = arith.constant 12 : index
    %c0_56 = arith.constant 0 : index
    %145 = vector.load %arg4[%c12, %c0_56] : memref<24x128xf32, #tpu.memory_space<vmem>>, vector<1x32xf32>
    %146 = vector.broadcast %145 : vector<1x32xf32> to vector<16x32xf32>
    %147 = arith.addf %144, %146 : vector<16x32xf32>
    %c13 = arith.constant 13 : index
    %c0_57 = arith.constant 0 : index
    %148 = vector.load %arg4[%c13, %c0_57] : memref<24x128xf32, #tpu.memory_space<vmem>>, vector<1x32xf32>
    %c14 = arith.constant 14 : index
    %c0_58 = arith.constant 0 : index
    %149 = vector.load %arg4[%c14, %c0_58] : memref<24x128xf32, #tpu.memory_space<vmem>>, vector<1x32xf32>
    %cst_59 = arith.constant dense<0.000000e+00> : vector<16xf32>
    %150 = vector.multi_reduction <add>, %147, %cst_59 [1] : vector<16x32xf32> to vector<16xf32>
    %151 = vector.shape_cast %150 : vector<16xf32> to vector<16x1xf32>
    %cst_60 = arith.constant 3.200000e+01 : f32
    %152 = vector.broadcast %cst_60 : f32 to vector<16x1xf32>
    %153 = arith.divf %151, %152 : vector<16x1xf32>
    %154 = vector.broadcast %153 : vector<16x1xf32> to vector<16x32xf32>
    %155 = arith.subf %147, %154 : vector<16x32xf32>
    %156 = arith.mulf %155, %155 : vector<16x32xf32>
    %cst_61 = arith.constant dense<0.000000e+00> : vector<16xf32>
    %157 = vector.multi_reduction <add>, %156, %cst_61 [1] : vector<16x32xf32> to vector<16xf32>
    %158 = vector.shape_cast %157 : vector<16xf32> to vector<16x1xf32>
    %cst_62 = arith.constant 3.200000e+01 : f32
    %159 = vector.broadcast %cst_62 : f32 to vector<16x1xf32>
    %160 = arith.divf %158, %159 : vector<16x1xf32>
    %161 = vector.broadcast %153 : vector<16x1xf32> to vector<16x32xf32>
    %162 = arith.subf %147, %161 : vector<16x32xf32>
    %cst_63 = arith.constant 9.99999974E-6 : f32
    %163 = vector.broadcast %cst_63 : f32 to vector<16x1xf32>
    %164 = arith.addf %160, %163 : vector<16x1xf32>
    %165 = math.rsqrt %164 : vector<16x1xf32>
    %166 = vector.broadcast %165 : vector<16x1xf32> to vector<16x32xf32>
    %167 = arith.mulf %162, %166 : vector<16x32xf32>
    %168 = vector.broadcast %148 : vector<1x32xf32> to vector<16x32xf32>
    %169 = arith.mulf %167, %168 : vector<16x32xf32>
    %170 = vector.broadcast %149 : vector<1x32xf32> to vector<16x32xf32>
    %171 = arith.addf %169, %170 : vector<16x32xf32>
    %cst_64 = arith.constant 0.000000e+00 : f32
    %172 = vector.broadcast %cst_64 : f32 to vector<16x32xf32>
    %173 = arith.maximumf %171, %172 : vector<16x32xf32>
    %c0_65 = arith.constant 0 : index
    %c256 = arith.constant 256 : index
    %174 = vector.load %arg3[%c0_65, %c256] : memref<32x512xf32, #tpu.memory_space<vmem>>, vector<32x16xf32>
    %cst_66 = arith.constant dense<0.000000e+00> : vector<16x16xf32>
    %175 = tpu.matmul %173, %174, %cst_66 {dimension_numbers = #tpu.dot_dimension_numbers<[1], [0], [0], [1], [0, 0, 1, 1], [], []>} : vector<16x32xf32>, vector<32x16xf32>, vector<16x16xf32> -> vector<16x16xf32>
    %c15 = arith.constant 15 : index
    %c0_67 = arith.constant 0 : index
    %176 = vector.load %arg4[%c15, %c0_67] : memref<24x128xf32, #tpu.memory_space<vmem>>, vector<1x16xf32>
    %177 = vector.broadcast %176 : vector<1x16xf32> to vector<16x16xf32>
    %178 = arith.addf %175, %177 : vector<16x16xf32>
    %c16_68 = arith.constant 16 : index
    %c0_69 = arith.constant 0 : index
    %179 = vector.load %arg4[%c16_68, %c0_69] : memref<24x128xf32, #tpu.memory_space<vmem>>, vector<1x16xf32>
    %c17 = arith.constant 17 : index
    %c0_70 = arith.constant 0 : index
    %180 = vector.load %arg4[%c17, %c0_70] : memref<24x128xf32, #tpu.memory_space<vmem>>, vector<1x16xf32>
    %cst_71 = arith.constant dense<0.000000e+00> : vector<16xf32>
    %181 = vector.multi_reduction <add>, %178, %cst_71 [1] : vector<16x16xf32> to vector<16xf32>
    %182 = vector.shape_cast %181 : vector<16xf32> to vector<16x1xf32>
    %cst_72 = arith.constant 1.600000e+01 : f32
    %183 = vector.broadcast %cst_72 : f32 to vector<16x1xf32>
    %184 = arith.divf %182, %183 : vector<16x1xf32>
    %185 = vector.broadcast %184 : vector<16x1xf32> to vector<16x16xf32>
    %186 = arith.subf %178, %185 : vector<16x16xf32>
    %187 = arith.mulf %186, %186 : vector<16x16xf32>
    %cst_73 = arith.constant dense<0.000000e+00> : vector<16xf32>
    %188 = vector.multi_reduction <add>, %187, %cst_73 [1] : vector<16x16xf32> to vector<16xf32>
    %189 = vector.shape_cast %188 : vector<16xf32> to vector<16x1xf32>
    %cst_74 = arith.constant 1.600000e+01 : f32
    %190 = vector.broadcast %cst_74 : f32 to vector<16x1xf32>
    %191 = arith.divf %189, %190 : vector<16x1xf32>
    %192 = vector.broadcast %184 : vector<16x1xf32> to vector<16x16xf32>
    %193 = arith.subf %178, %192 : vector<16x16xf32>
    %cst_75 = arith.constant 9.99999974E-6 : f32
    %194 = vector.broadcast %cst_75 : f32 to vector<16x1xf32>
    %195 = arith.addf %191, %194 : vector<16x1xf32>
    %196 = math.rsqrt %195 : vector<16x1xf32>
    %197 = vector.broadcast %196 : vector<16x1xf32> to vector<16x16xf32>
    %198 = arith.mulf %193, %197 : vector<16x16xf32>
    %199 = vector.broadcast %179 : vector<1x16xf32> to vector<16x16xf32>
    %200 = arith.mulf %198, %199 : vector<16x16xf32>
    %201 = vector.broadcast %180 : vector<1x16xf32> to vector<16x16xf32>
    %202 = arith.addf %200, %201 : vector<16x16xf32>
    %cst_76 = arith.constant 0.000000e+00 : f32
    %203 = vector.broadcast %cst_76 : f32 to vector<16x16xf32>
    %204 = arith.maximumf %202, %203 : vector<16x16xf32>
    %205 = vector.shape_cast %204 : vector<16x16xf32> to vector<2x8x16xf32>
    %cst_77 = arith.constant dense<0xFF800000> : vector<2x16xf32>
    %206 = vector.multi_reduction <maximumf>, %205, %cst_77 [1] : vector<2x8x16xf32> to vector<2x16xf32>
    %c40 = arith.constant 40 : index
    %c0_78 = arith.constant 0 : index
    %207 = vector.load %arg2[%c40, %c0_78] : memref<72x32xf32, #tpu.memory_space<vmem>>, vector<16x32xf32>
    %cst_79 = arith.constant dense<0.000000e+00> : vector<2x32xf32>
    %208 = tpu.matmul %206, %207, %cst_79 {dimension_numbers = #tpu.dot_dimension_numbers<[1], [0], [0], [1], [0, 0, 1, 1], [], []>} : vector<2x16xf32>, vector<16x32xf32>, vector<2x32xf32> -> vector<2x32xf32>
    %209 = vector.shape_cast %208 : vector<2x32xf32> to vector<2x1x32xf32>
    %210 = vector.shape_cast %209 : vector<2x1x32xf32> to vector<2x1x32xf32>
    %211 = vector.broadcast %210 : vector<2x1x32xf32> to vector<2x8x32xf32>
    %212 = vector.shape_cast %211 : vector<2x8x32xf32> to vector<16x32xf32>
    %c56 = arith.constant 56 : index
    %c0_80 = arith.constant 0 : index
    %213 = vector.load %arg2[%c56, %c0_80] : memref<72x32xf32, #tpu.memory_space<vmem>>, vector<16x32xf32>
    %cst_81 = arith.constant dense<0.000000e+00> : vector<16x32xf32>
    %214 = tpu.matmul %204, %213, %cst_81 {dimension_numbers = #tpu.dot_dimension_numbers<[1], [0], [0], [1], [0, 0, 1, 1], [], []>} : vector<16x16xf32>, vector<16x32xf32>, vector<16x32xf32> -> vector<16x32xf32>
    %215 = arith.addf %212, %214 : vector<16x32xf32>
    %c18 = arith.constant 18 : index
    %c0_82 = arith.constant 0 : index
    %216 = vector.load %arg4[%c18, %c0_82] : memref<24x128xf32, #tpu.memory_space<vmem>>, vector<1x32xf32>
    %217 = vector.broadcast %216 : vector<1x32xf32> to vector<16x32xf32>
    %218 = arith.addf %215, %217 : vector<16x32xf32>
    %c19 = arith.constant 19 : index
    %c0_83 = arith.constant 0 : index
    %219 = vector.load %arg4[%c19, %c0_83] : memref<24x128xf32, #tpu.memory_space<vmem>>, vector<1x32xf32>
    %c20 = arith.constant 20 : index
    %c0_84 = arith.constant 0 : index
    %220 = vector.load %arg4[%c20, %c0_84] : memref<24x128xf32, #tpu.memory_space<vmem>>, vector<1x32xf32>
    %cst_85 = arith.constant dense<0.000000e+00> : vector<16xf32>
    %221 = vector.multi_reduction <add>, %218, %cst_85 [1] : vector<16x32xf32> to vector<16xf32>
    %222 = vector.shape_cast %221 : vector<16xf32> to vector<16x1xf32>
    %cst_86 = arith.constant 3.200000e+01 : f32
    %223 = vector.broadcast %cst_86 : f32 to vector<16x1xf32>
    %224 = arith.divf %222, %223 : vector<16x1xf32>
    %225 = vector.broadcast %224 : vector<16x1xf32> to vector<16x32xf32>
    %226 = arith.subf %218, %225 : vector<16x32xf32>
    %227 = arith.mulf %226, %226 : vector<16x32xf32>
    %cst_87 = arith.constant dense<0.000000e+00> : vector<16xf32>
    %228 = vector.multi_reduction <add>, %227, %cst_87 [1] : vector<16x32xf32> to vector<16xf32>
    %229 = vector.shape_cast %228 : vector<16xf32> to vector<16x1xf32>
    %cst_88 = arith.constant 3.200000e+01 : f32
    %230 = vector.broadcast %cst_88 : f32 to vector<16x1xf32>
    %231 = arith.divf %229, %230 : vector<16x1xf32>
    %232 = vector.broadcast %224 : vector<16x1xf32> to vector<16x32xf32>
    %233 = arith.subf %218, %232 : vector<16x32xf32>
    %cst_89 = arith.constant 9.99999974E-6 : f32
    %234 = vector.broadcast %cst_89 : f32 to vector<16x1xf32>
    %235 = arith.addf %231, %234 : vector<16x1xf32>
    %236 = math.rsqrt %235 : vector<16x1xf32>
    %237 = vector.broadcast %236 : vector<16x1xf32> to vector<16x32xf32>
    %238 = arith.mulf %233, %237 : vector<16x32xf32>
    %239 = vector.broadcast %219 : vector<1x32xf32> to vector<16x32xf32>
    %240 = arith.mulf %238, %239 : vector<16x32xf32>
    %241 = vector.broadcast %220 : vector<1x32xf32> to vector<16x32xf32>
    %242 = arith.addf %240, %241 : vector<16x32xf32>
    %cst_90 = arith.constant 0.000000e+00 : f32
    %243 = vector.broadcast %cst_90 : f32 to vector<16x32xf32>
    %244 = arith.maximumf %242, %243 : vector<16x32xf32>
    %c0_91 = arith.constant 0 : index
    %c384 = arith.constant 384 : index
    %245 = vector.load %arg3[%c0_91, %c384] : memref<32x512xf32, #tpu.memory_space<vmem>>, vector<32x32xf32>
    %cst_92 = arith.constant dense<0.000000e+00> : vector<16x32xf32>
    %246 = tpu.matmul %244, %245, %cst_92 {dimension_numbers = #tpu.dot_dimension_numbers<[1], [0], [0], [1], [0, 0, 1, 1], [], []>} : vector<16x32xf32>, vector<32x32xf32>, vector<16x32xf32> -> vector<16x32xf32>
    %c21 = arith.constant 21 : index
    %c0_93 = arith.constant 0 : index
    %247 = vector.load %arg4[%c21, %c0_93] : memref<24x128xf32, #tpu.memory_space<vmem>>, vector<1x32xf32>
    %248 = vector.broadcast %247 : vector<1x32xf32> to vector<16x32xf32>
    %249 = arith.addf %246, %248 : vector<16x32xf32>
    %c22 = arith.constant 22 : index
    %c0_94 = arith.constant 0 : index
    %250 = vector.load %arg4[%c22, %c0_94] : memref<24x128xf32, #tpu.memory_space<vmem>>, vector<1x32xf32>
    %c23 = arith.constant 23 : index
    %c0_95 = arith.constant 0 : index
    %251 = vector.load %arg4[%c23, %c0_95] : memref<24x128xf32, #tpu.memory_space<vmem>>, vector<1x32xf32>
    %cst_96 = arith.constant dense<0.000000e+00> : vector<16xf32>
    %252 = vector.multi_reduction <add>, %249, %cst_96 [1] : vector<16x32xf32> to vector<16xf32>
    %253 = vector.shape_cast %252 : vector<16xf32> to vector<16x1xf32>
    %cst_97 = arith.constant 3.200000e+01 : f32
    %254 = vector.broadcast %cst_97 : f32 to vector<16x1xf32>
    %255 = arith.divf %253, %254 : vector<16x1xf32>
    %256 = vector.broadcast %255 : vector<16x1xf32> to vector<16x32xf32>
    %257 = arith.subf %249, %256 : vector<16x32xf32>
    %258 = arith.mulf %257, %257 : vector<16x32xf32>
    %cst_98 = arith.constant dense<0.000000e+00> : vector<16xf32>
    %259 = vector.multi_reduction <add>, %258, %cst_98 [1] : vector<16x32xf32> to vector<16xf32>
    %260 = vector.shape_cast %259 : vector<16xf32> to vector<16x1xf32>
    %cst_99 = arith.constant 3.200000e+01 : f32
    %261 = vector.broadcast %cst_99 : f32 to vector<16x1xf32>
    %262 = arith.divf %260, %261 : vector<16x1xf32>
    %263 = vector.broadcast %255 : vector<16x1xf32> to vector<16x32xf32>
    %264 = arith.subf %249, %263 : vector<16x32xf32>
    %cst_100 = arith.constant 9.99999974E-6 : f32
    %265 = vector.broadcast %cst_100 : f32 to vector<16x1xf32>
    %266 = arith.addf %262, %265 : vector<16x1xf32>
    %267 = math.rsqrt %266 : vector<16x1xf32>
    %268 = vector.broadcast %267 : vector<16x1xf32> to vector<16x32xf32>
    %269 = arith.mulf %264, %268 : vector<16x32xf32>
    %270 = vector.broadcast %250 : vector<1x32xf32> to vector<16x32xf32>
    %271 = arith.mulf %269, %270 : vector<16x32xf32>
    %272 = vector.broadcast %251 : vector<1x32xf32> to vector<16x32xf32>
    %273 = arith.addf %271, %272 : vector<16x32xf32>
    %cst_101 = arith.constant 0.000000e+00 : f32
    %274 = vector.broadcast %cst_101 : f32 to vector<16x32xf32>
    %275 = arith.maximumf %273, %274 : vector<16x32xf32>
    %276 = vector.shape_cast %275 : vector<16x32xf32> to vector<2x8x32xf32>
    %cst_102 = arith.constant dense<0xFF800000> : vector<2x32xf32>
    %277 = vector.multi_reduction <maximumf>, %276, %cst_102 [1] : vector<2x8x32xf32> to vector<2x32xf32>
    %278 = tpu.concatenate %277, %277 in 1 : vector<2x32xf32>, vector<2x32xf32> -> vector<2x64xf32>
    %cst_103 = arith.constant 0.000000e+00 : f32
    %279 = vector.broadcast %cst_103 : f32 to vector<2x64xf32>
    %280 = tpu.concatenate %278, %279 in 1 : vector<2x64xf32>, vector<2x64xf32> -> vector<2x128xf32>
    %c0_104 = arith.constant 0 : index
    %c0_105 = arith.constant 0 : index
    %281 = vector.load %arg5[%c0_104, %c0_105] : memref<2x128xf32, #tpu.memory_space<vmem>>, vector<2x128xf32>
    tpu.vector_store %arg5[%c0_104, %c0_105], %280 {strides = array<i32>} : memref<2x128xf32, #tpu.memory_space<vmem>>, vector<2x128xf32>,
    return
  }
  func.func @transform_0(%arg0: i32) -> (i32, i32) {
    %c0_i32 = arith.constant 0 : i32
    %c0_i32_0 = arith.constant 0 : i32
    return %arg0, %c0_i32 : i32, i32
  }
  func.func @transform_1(%arg0: i32) -> (i32, i32) {
    %c0_i32 = arith.constant 0 : i32
    %c0_i32_0 = arith.constant 0 : i32
    %c0_i32_1 = arith.constant 0 : i32
    return %c0_i32, %c0_i32_0 : i32, i32
  }
  func.func @transform_2(%arg0: i32) -> (i32, i32) {
    %c0_i32 = arith.constant 0 : i32
    %c0_i32_0 = arith.constant 0 : i32
    %c0_i32_1 = arith.constant 0 : i32
    return %c0_i32, %c0_i32_0 : i32, i32
  }
  func.func @transform_3(%arg0: i32) -> (i32, i32) {
    %c0_i32 = arith.constant 0 : i32
    %c0_i32_0 = arith.constant 0 : i32
    %c0_i32_1 = arith.constant 0 : i32
    return %c0_i32, %c0_i32_0 : i32, i32
  }
  func.func @transform_4(%arg0: i32) -> (i32, i32) {
    %c0_i32 = arith.constant 0 : i32
    %c0_i32_0 = arith.constant 0 : i32
    return %arg0, %c0_i32 : i32, i32
  }
}

</mosaic_0001>

<llo_original>
// kernel: tpu_custom_call.1
$region0: #{tpu_custom_call.1}
  #allocation0 [shape = 'u32[]', space=smem, size = 0x4, offset = 0x4, fixed_abs, tag = 'smem constant byte address 0x4 - core index']
  #allocation1 [shape = 'u32[144,128]{1,0:T(1,128)}', space=vmem, size = 0x12000, scoped, tag = 'internal scratch']
  %s0 = inlined_call_operand.vmem [shape: f32[16,4], index: 0, kind: input, shape index: {}]
  %s1 = inlined_call_operand.vmem [shape: f32[72,32], index: 1, kind: input, shape index: {}]
  %s2 = inlined_call_operand.vmem [shape: f32[32,512], index: 2, kind: input, shape index: {}]
  %s3 = inlined_call_operand.hbm [shape: f32[24,128], index: 3, kind: input, shape index: {}]
  %s4 = inlined_call_operand.hbm [shape: f32[2,128], index: 4, kind: output, shape index: {}]
  %s5 = sld [smem:[#allocation0]]
  $region30: #{tpu_custom_call.1} parent=0
    _
  %s7 = ssub.s32 1, %s5
  %s8 = scalar_select 0, %s7, %s5
  $region1: #{tpu_custom_call.1} parent=0
    #allocation2 [shape = 'u8[12288]{0}', space=vmem, size = 0x3000, scoped, tag = 'input window, operand 3, single buffered']
    #allocation3 [shape = 's32[1]{0}', space=sflag, size = 0x4, scoped, tag = 'scoped memory for tpu_custom_call.1']
    #allocation4 [shape = 's32[1]{0}', space=sflag, size = 0x4, scoped, tag = 'scoped memory for tpu_custom_call.1']
    #allocation5 [shape = 'u8[1024]{0}', space=vmem, size = 0x400, scoped, tag = 'output window, operand 0, single buffered']
    %9 = vsyncpa [#allocation3], 0
    %10 = vsyncpa [#allocation4], 0
    // Predicated region
    $region2: #{tpu_custom_call.1} parent=1 // pred_check
      _
    $region3: #{tpu_custom_call.1} parent=1 // pred_check_branch
      %12 = sbr.rel (0) target = $region5
    $region4: #{tpu_custom_call.1} parent=1 // pred_region
      _
    $region5: #{tpu_custom_call.1} parent=1 // pred_fallthru
      _
    // Predicated region
    $region6: #{tpu_custom_call.1} parent=1 // pred_check
      _
    $region7: #{tpu_custom_call.1} parent=1 // pred_check_branch
      %14 = sbr.rel (0) target = $region9
    $region8: #{tpu_custom_call.1} parent=1 // pred_region
      _
    $region9: #{tpu_custom_call.1} parent=1 // pred_fallthru
      _
    // Predicated region
    $region10: #{tpu_custom_call.1} parent=1 // pred_check
      _
    $region11: #{tpu_custom_call.1} parent=1 // pred_check_branch
      %16 = sbr.rel (0) target = $region13
    $region12: #{tpu_custom_call.1} parent=1 // pred_region
      _
    $region13: #{tpu_custom_call.1} parent=1 // pred_fallthru
      _
    // Predicated region
    $region14: #{tpu_custom_call.1} parent=1 // pred_check
      _
    $region15: #{tpu_custom_call.1} parent=1 // pred_check_branch
      %18 = sbr.rel (0) target = $region17
    $region16: #{tpu_custom_call.1} parent=1 // pred_region
      %s20 = ssub.s32 384, 384
      %21 = vsyncadd [#allocation3], %s20
      %s22 = sshll.u32 [#allocation2], 4
      %s23 = int_to_ptr.vmem [resolvable:$true] %s22
      %28 = dma.hbm_to_vmem [thread:$0]  %s3, 384, %s23, [#allocation3], 128, 128, 8
    $region17: #{tpu_custom_call.1} parent=1 // pred_fallthru
      _
    // Predicated region
    $region18: #{tpu_custom_call.1} parent=1 // pred_check
      _
    $region19: #{tpu_custom_call.1} parent=1 // pred_check_branch
      %30 = sbr.rel (0) target = $region21
    $region20: #{tpu_custom_call.1} parent=1 // pred_region
      %31 = dma.done [#allocation3], 384
    $region21: #{tpu_custom_call.1} parent=1 // pred_fallthru
      _
    %v32 = vld [vmem:[%s0] sm:$0xff]
    %v33 = vld [vmem:[%s0 + $0x8] sm:$0xff]
    %v34 = vld [vmem:[%s1] sm:$0xf]
    %v35 = vld [vmem:[#allocation2] sm:$0x1]
    %v36 = vlaneseq
    %v37 = vshrl.u32 %v36, 7
    %v38 = vsub.s32 0, %v37
    %v39 = vrot.slane %v35, %v38
    %vm40 = vcmask 31744
    %v42 = vsel %vm40, %v32, 0
    %v45 = vsel %vm40, %v33, 0
    %vm47 = vcmask 1043456
    %v49 = vsel %vm47, %v34, 0
    %51 = vmatprep.subr.mxu0 0.0
    %52 = vmatpush1.msra.mxu0 %v49
    %53 = vmatprep.subr.mxu0 0.0
    %54 = vmatpush1.msra.mxu0 0.0
    %55 = vmatprep.subr.mxu0 0.0
    %56 = vmatpush1.msra.mxu0 0.0
    %57 = vmatprep.subr.mxu0 0.0
    %58 = vmatpush1.msra.mxu0 0.0
    %59 = vmatprep.subr.mxu0 0.0
    %60 = vmatpush1.msra.mxu0 0.0
    %61 = vmatprep.subr.mxu0 0.0
    %62 = vmatpush1.msra.mxu0 0.0
    %63 = vmatprep.subr.mxu0 0.0
    %64 = vmatpush1.msra.mxu0 0.0
    %65 = vmatprep.subr.mxu0 0.0
    %66 = vmatpush1.msra.mxu0 0.0
    %67 = vmatprep.subr.mxu0 0.0
    %68 = vmatpush1.msra.mxu0 0.0
    %69 = vmatprep.subr.mxu0 0.0
    %70 = vmatpush1.msra.mxu0 0.0
    %71 = vmatprep.subr.mxu0 0.0
    %72 = vmatpush1.msra.mxu0 0.0
    %73 = vmatprep.subr.mxu0 0.0
    %74 = vmatpush1.msra.mxu0 0.0
    %75 = vmatprep.subr.mxu0 0.0
    %76 = vmatpush1.msra.mxu0 0.0
    %77 = vmatprep.subr.mxu0 0.0
    %78 = vmatpush1.msra.mxu0 0.0
    %79 = vmatprep.subr.mxu0 0.0
    %80 = vmatpush1.msra.mxu0 0.0
    %81 = vmatprep.subr.mxu0 0.0
    %82 = vmatpush1.msra.mxu0 0.0
    %83 = vmatprep.subr.mxu0 0.0
    %84 = vmatpush1.msra.mxu0 0.0
    %85 = vmatprep.subr.mxu0 0.0
    %86 = vmatpush1.msra.mxu0 0.0
    %87 = vmatprep.subr.mxu0 0.0
    %88 = vmatpush1.msra.mxu0 0.0
    %89 = vmatprep.subr.mxu0 0.0
    %90 = vmatpush1.msra.mxu0 0.0
    %91 = vmatprep.subr.mxu0 0.0
    %92 = vmatpush1.msra.mxu0 0.0
    %93 = vmatprep.subr.mxu0 0.0
    %94 = vmatpush1.msra.mxu0 0.0
    %95 = vmatprep.subr.mxu0 0.0
    %96 = vmatpush1.msra.mxu0 0.0
    %97 = vmatprep.subr.mxu0 0.0
    %98 = vmatpush1.msra.mxu0 0.0
    %99 = vmatprep.subr.mxu0 0.0
    %100 = vmatpush1.msra.mxu0 0.0
    %101 = vmatprep.subr.mxu0 0.0
    %102 = vmatpush1.msra.mxu0 0.0
    %103 = vmatprep.subr.mxu0 0.0
    %104 = vmatpush1.msra.mxu0 0.0
    %105 = vmatprep.subr.mxu0 0.0
    %106 = vmatpush1.msra.mxu0 0.0
    %107 = vmatprep.subr.mxu0 0.0
    %108 = vmatpush1.msra.mxu0 0.0
    %109 = vmatprep.subr.mxu0 0.0
    %110 = vmatpush1.msra.mxu0 0.0
    %111 = vmatprep.subr.mxu0 0.0
    %112 = vmatpush1.msra.mxu0 0.0
    %113 = vmatprep.subr.mxu0 0.0
    %114 = vmatpush1.msra.mxu0 0.0
    %115 = vmatprep.mubr.f32.mxu0 0.0
    %116 = vmatmul.mubr.f32.gmra.mrb[0].mxu0 %v42
    %v117 = vpop.f32.mrb[0].mxu0
    %v118 = vadd.f32 %v39, %v117
    %v119 = vpop.f32.mrb[0].mxu0
    %120 = vmatprep.mubr.f32.mxu0 0.0
    %121 = vmatmul.mubr.f32.gmra.mrb[0].mxu0 %v45
    %v122 = vpop.f32.mrb[0].mxu0
    %v123 = vadd.f32 %v39, %v122
    %v124 = vpop.f32.mrb[0].mxu0
    %125 = vdwg.mxu0
    %v126 = vld [vmem:[#allocation2 + $0x1] sm:$0x1]
    %v127 = vld [vmem:[#allocation2 + $0x2] sm:$0x1]
    %vm128 = vcmask 261120
    %v129 = vsel %vm128, %v118, 0.0
    %130 = vadd.xlane.f32.xlu0 %v129
    %v131 = vpop.xlane.xlu0 %130
    %v132 = vsel %vm128, %v123, 0.0
    %133 = vadd.xlane.f32.xlu0 %v132
    %v134 = vpop.xlane.xlu0 %133
    %v135 = vrcp.pop 32.0
    %v136 = vmul.f32 %v131, %v135
    %v137 = vmul.f32 %v134, %v135
    %v138 = vsub.f32 %v118, %v136
    %v139 = vsub.f32 %v123, %v137
    %v140 = vmul.f32 %v138, %v138
    %v141 = vmul.f32 %v139, %v139
    %v142 = vsel %vm128, %v140, 0.0
    %143 = vadd.xlane.f32.xlu0 %v142
    %v144 = vpop.xlane.xlu0 %143
    %v145 = vsel %vm128, %v141, 0.0
    %146 = vadd.xlane.f32.xlu0 %v145
    %v147 = vpop.xlane.xlu0 %146
    %v148 = vmul.f32 %v144, %v135
    %v149 = vmul.f32 %v147, %v135
    %v150 = vadd.f32 %v148, 1e-05
    %v151 = vadd.f32 %v149, 1e-05
    %v152 = vrsqrt.pop %v150
    %v153 = vrsqrt.pop %v151
    %v154 = vmul.f32 %v138, %v152
    %v155 = vmul.f32 %v139, %v153
    %v156 = vlaneseq
    %v157 = vshrl.u32 %v156, 7
    %v158 = vsub.s32 0, %v157
    %v159 = vrot.slane %v126, %v158
    %v160 = vmul.f32 %v154, %v159
    %v161 = vmul.f32 %v155, %v159
    %v162 = vlaneseq
    %v163 = vshrl.u32 %v162, 7
    %v164 = vsub.s32 0, %v163
    %v165 = vrot.slane %v127, %v164
    %v166 = vadd.f32 %v160, %v165
    %v167 = vadd.f32 %v161, %v165
    %v168 = vmax.f32 %v166, 0.0
    %v169 = vmax.f32 %v167, 0.0
    %v170 = vld [vmem:[%s2] sm:$0xff]
    %v171 = vld [vmem:[%s2 + $0x20] sm:$0xff]
    %v172 = vld [vmem:[%s2 + $0x40] sm:$0xff]
    %v173 = vld [vmem:[%s2 + $0x60] sm:$0xff]
    %v174 = vld [vmem:[#allocation2 + $0x3] sm:$0x1]
    %v175 = vlaneseq
    %v176 = vshrl.u32 %v175, 7
    %v177 = vsub.s32 0, %v176
    %v178 = vrot.slane %v174, %v177
    %v180 = vsel %vm128, %v168, 0
    %v183 = vsel %vm128, %v169, 0
    %185 = vmatprep.subr.mxu0 0.0
    %186 = vmatpush1.msra.mxu0 %v170
    %187 = vmatprep.subr.mxu0 0.0
    %188 = vmatpush1.msra.mxu0 %v171
    %189 = vmatprep.subr.mxu0 0.0
    %190 = vmatpush1.msra.mxu0 %v172
    %191 = vmatprep.subr.mxu0 0.0
    %192 = vmatpush1.msra.mxu0 %v173
    %193 = vmatprep.subr.mxu0 0.0
    %194 = vmatpush1.msra.mxu0 0.0
    %195 = vmatprep.subr.mxu0 0.0
    %196 = vmatpush1.msra.mxu0 0.0
    %197 = vmatprep.subr.mxu0 0.0
    %198 = vmatpush1.msra.mxu0 0.0
    %199 = vmatprep.subr.mxu0 0.0
    %200 = vmatpush1.msra.mxu0 0.0
    %201 = vmatprep.subr.mxu0 0.0
    %202 = vmatpush1.msra.mxu0 0.0
    %203 = vmatprep.subr.mxu0 0.0
    %204 = vmatpush1.msra.mxu0 0.0
    %205 = vmatprep.subr.mxu0 0.0
    %206 = vmatpush1.msra.mxu0 0.0
    %207 = vmatprep.subr.mxu0 0.0
    %208 = vmatpush1.msra.mxu0 0.0
    %209 = vmatprep.subr.mxu0 0.0
    %210 = vmatpush1.msra.mxu0 0.0
    %211 = vmatprep.subr.mxu0 0.0
    %212 = vmatpush1.msra.mxu0 0.0
    %213 = vmatprep.subr.mxu0 0.0
    %214 = vmatpush1.msra.mxu0 0.0
    %215 = vmatprep.subr.mxu0 0.0
    %216 = vmatpush1.msra.mxu0 0.0
    %217 = vmatprep.subr.mxu0 0.0
    %218 = vmatpush1.msra.mxu0 0.0
    %219 = vmatprep.subr.mxu0 0.0
    %220 = vmatpush1.msra.mxu0 0.0
    %221 = vmatprep.subr.mxu0 0.0
    %222 = vmatpush1.msra.mxu0 0.0
    %223 = vmatprep.subr.mxu0 0.0
    %224 = vmatpush1.msra.mxu0 0.0
    %225 = vmatprep.subr.mxu0 0.0
    %226 = vmatpush1.msra.mxu0 0.0
    %227 = vmatprep.subr.mxu0 0.0
    %228 = vmatpush1.msra.mxu0 0.0
    %229 = vmatprep.subr.mxu0 0.0
    %230 = vmatpush1.msra.mxu0 0.0
    %231 = vmatprep.subr.mxu0 0.0
    %232 = vmatpush1.msra.mxu0 0.0
    %233 = vmatprep.subr.mxu0 0.0
    %234 = vmatpush1.msra.mxu0 0.0
    %235 = vmatprep.subr.mxu0 0.0
    %236 = vmatpush1.msra.mxu0 0.0
    %237 = vmatprep.subr.mxu0 0.0
    %238 = vmatpush1.msra.mxu0 0.0
    %239 = vmatprep.subr.mxu0 0.0
    %240 = vmatpush1.msra.mxu0 0.0
    %241 = vmatprep.subr.mxu0 0.0
    %242 = vmatpush1.msra.mxu0 0.0
    %243 = vmatprep.subr.mxu0 0.0
    %244 = vmatpush1.msra.mxu0 0.0
    %245 = vmatprep.subr.mxu0 0.0
    %246 = vmatpush1.msra.mxu0 0.0
    %247 = vmatprep.subr.mxu0 0.0
    %248 = vmatpush1.msra.mxu0 0.0
    %249 = vmatprep.mubr.f32.mxu0 0.0
    %250 = vmatmul.mubr.f32.gmra.mrb[0].mxu0 %v180
    %v251 = vpop.f32.mrb[0].mxu0
    %v252 = vadd.f32 %v178, %v251
    %v253 = vpop.f32.mrb[0].mxu0
    %254 = vmatprep.mubr.f32.mxu0 0.0
    %255 = vmatmul.mubr.f32.gmra.mrb[0].mxu0 %v183
    %v256 = vpop.f32.mrb[0].mxu0
    %v257 = vadd.f32 %v178, %v256
    %v258 = vpop.f32.mrb[0].mxu0
    %259 = vdwg.mxu0
    %v260 = vld [vmem:[#allocation2 + $0x4] sm:$0x1]
    %v261 = vld [vmem:[#allocation2 + $0x5] sm:$0x1]
    %v262 = vsel %vm40, %v252, 0.0
    %263 = vadd.xlane.f32.xlu0 %v262
    %v264 = vpop.xlane.xlu0 %263
    %v265 = vsel %vm40, %v257, 0.0
    %266 = vadd.xlane.f32.xlu0 %v265
    %v267 = vpop.xlane.xlu0 %266
    %v268 = vrcp.pop 4.0
    %v269 = vmul.f32 %v264, %v268
    %v270 = vmul.f32 %v267, %v268
    %v271 = vsub.f32 %v252, %v269
    %v272 = vsub.f32 %v257, %v270
    %v273 = vmul.f32 %v271, %v271
    %v274 = vmul.f32 %v272, %v272
    %v275 = vsel %vm40, %v273, 0.0
    %276 = vadd.xlane.f32.xlu0 %v275
    %v277 = vpop.xlane.xlu0 %276
    %v278 = vsel %vm40, %v274, 0.0
    %279 = vadd.xlane.f32.xlu0 %v278
    %v280 = vpop.xlane.xlu0 %279
    %v281 = vmul.f32 %v277, %v268
    %v282 = vmul.f32 %v280, %v268
    %v283 = vadd.f32 %v281, 1e-05
    %v284 = vadd.f32 %v282, 1e-05
    %v285 = vrsqrt.pop %v283
    %v286 = vrsqrt.pop %v284
    %v287 = vmul.f32 %v271, %v285
    %v288 = vmul.f32 %v272, %v286
    %v289 = vlaneseq
    %v290 = vshrl.u32 %v289, 7
    %v291 = vsub.s32 0, %v290
    %v292 = vrot.slane %v260, %v291
    %v293 = vmul.f32 %v287, %v292
    %v294 = vmul.f32 %v288, %v292
    %v295 = vlaneseq
    %v296 = vshrl.u32 %v295, 7
    %v297 = vsub.s32 0, %v296
    %v298 = vrot.slane %v261, %v297
    %v299 = vadd.f32 %v293, %v298
    %v300 = vadd.f32 %v294, %v298
    %v301 = vmax.f32 %v299, 0.0
    %v302 = vmax.f32 %v300, 0.0
    %v303 = vsel %vm40, %v301, -inf
    %v304 = vrot.slane %v303, 4
    %v305 = vmax.f32 %v303, %v304
    %v306 = vrot.slane %v305, 2
    %v307 = vmax.f32 %v305, %v306
    %v308 = vrot.slane %v307, 1
    %v309 = vmax.f32 %v307, %v308
    %v310 = vsel %vm40, %v302, -inf
    %v311 = vrot.slane %v310, 4
    %v312 = vmax.f32 %v310, %v311
    %v313 = vrot.slane %v312, 2
    %v314 = vmax.f32 %v312, %v313
    %v315 = vrot.slane %v314, 1
    %v316 = vmax.f32 %v314, %v315
    %v317 = vld [vmem:[%s1 + $0x8] sm:$0xf]
    %vm320 = vcmask 1041409
    %v321 = vsel %vm320, %v316, %v309
    %v322 = vsel %vm40, %v321, 0
    %v325 = vsel %vm47, %v317, 0
    %327 = vmatprep.subr.mxu0 0.0
    %328 = vmatpush1.msra.mxu0 %v325
    %329 = vmatprep.subr.mxu0 0.0
    %330 = vmatpush1.msra.mxu0 0.0
    %331 = vmatprep.subr.mxu0 0.0
    %332 = vmatpush1.msra.mxu0 0.0
    %333 = vmatprep.subr.mxu0 0.0
    %334 = vmatpush1.msra.mxu0 0.0
    %335 = vmatprep.subr.mxu0 0.0
    %336 = vmatpush1.msra.mxu0 0.0
    %337 = vmatprep.subr.mxu0 0.0
    %338 = vmatpush1.msra.mxu0 0.0
    %339 = vmatprep.subr.mxu0 0.0
    %340 = vmatpush1.msra.mxu0 0.0
    %341 = vmatprep.subr.mxu0 0.0
    %342 = vmatpush1.msra.mxu0 0.0
    %343 = vmatprep.subr.mxu0 0.0
    %344 = vmatpush1.msra.mxu0 0.0
    %345 = vmatprep.subr.mxu0 0.0
    %346 = vmatpush1.msra.mxu0 0.0
    %347 = vmatprep.subr.mxu0 0.0
    %348 = vmatpush1.msra.mxu0 0.0
    %349 = vmatprep.subr.mxu0 0.0
    %350 = vmatpush1.msra.mxu0 0.0
    %351 = vmatprep.subr.mxu0 0.0
    %352 = vmatpush1.msra.mxu0 0.0
    %353 = vmatprep.subr.mxu0 0.0
    %354 = vmatpush1.msra.mxu0 0.0
    %355 = vmatprep.subr.mxu0 0.0
    %356 = vmatpush1.msra.mxu0 0.0
    %357 = vmatprep.subr.mxu0 0.0
    %358 = vmatpush1.msra.mxu0 0.0
    %359 = vmatprep.subr.mxu0 0.0
    %360 = vmatpush1.msra.mxu0 0.0
    %361 = vmatprep.subr.mxu0 0.0
    %362 = vmatpush1.msra.mxu0 0.0
    %363 = vmatprep.subr.mxu0 0.0
    %364 = vmatpush1.msra.mxu0 0.0
    %365 = vmatprep.subr.mxu0 0.0
    %366 = vmatpush1.msra.mxu0 0.0
    %367 = vmatprep.subr.mxu0 0.0
    %368 = vmatpush1.msra.mxu0 0.0
    %369 = vmatprep.subr.mxu0 0.0
    %370 = vmatpush1.msra.mxu0 0.0
    %371 = vmatprep.subr.mxu0 0.0
    %372 = vmatpush1.msra.mxu0 0.0
    %373 = vmatprep.subr.mxu0 0.0
    %374 = vmatpush1.msra.mxu0 0.0
    %375 = vmatprep.subr.mxu0 0.0
    %376 = vmatpush1.msra.mxu0 0.0
    %377 = vmatprep.subr.mxu0 0.0
    %378 = vmatpush1.msra.mxu0 0.0
    %379 = vmatprep.subr.mxu0 0.0
    %380 = vmatpush1.msra.mxu0 0.0
    %381 = vmatprep.subr.mxu0 0.0
    %382 = vmatpush1.msra.mxu0 0.0
    %383 = vmatprep.subr.mxu0 0.0
    %384 = vmatpush1.msra.mxu0 0.0
    %385 = vmatprep.subr.mxu0 0.0
    %386 = vmatpush1.msra.mxu0 0.0
    %387 = vmatprep.subr.mxu0 0.0
    %388 = vmatpush1.msra.mxu0 0.0
    %389 = vmatprep.subr.mxu0 0.0
    %390 = vmatpush1.msra.mxu0 0.0
    %391 = vmatprep.mubr.f32.mxu0 0.0
    %392 = vmatmul.mubr.f32.gmra.mrb[0].mxu0 %v322
    %v393 = vpop.f32.mrb[0].mxu0
    %v394 = vadd.f32 0.0, %v393
    %v395 = vpop.f32.mrb[0].mxu0
    %396 = vdwg.mxu0
    %v399 = vunpack.c.l.s4 1966171168
    %v400 = vunpack.c.0.s8 %v399
    %v401 = vlaneseq
    %v402 = vshrl.u32 %v401, 7
    %v403 = vsub.s32 %v400, %v402
    %v404 = vrot.slane %v394, %v403
    %v405 = vcombine.high %v404, %v404
    %v407 = vunpack.c.l.s4 1966171168
    %v408 = vunpack.c.0.s8 %v407
    %v409 = vlaneseq
    %v410 = vshrl.u32 %v409, 7
    %v411 = vsub.s32 %v408, %v410
    %v412 = vrot.slane %v404, %v411
    %v414 = vunpack.c.l.s4 1966171168
    %v415 = vunpack.c.0.s8 %v414
    %v416 = vlaneseq
    %v417 = vshrl.u32 %v416, 7
    %v418 = vsub.s32 %v415, %v417
    %v419 = vrot.slane %v405, %v418
    %v420 = vlaneseq
    %v421 = vshrl.u32 %v420, 7
    %v422 = vsub.s32 0, %v421
    %v423 = vrot.slane %v412, %v422
    %v424 = vlaneseq
    %v425 = vshrl.u32 %v424, 7
    %v426 = vsub.s32 0, %v425
    %v427 = vrot.slane %v419, %v426
    %v430 = vld [vmem:[%s1 + $0x10] sm:$0xf]
    %v432 = vsel %vm40, %v301, 0
    %v435 = vsel %vm40, %v302, 0
    %v438 = vsel %vm47, %v430, 0
    %440 = vmatprep.subr.mxu0 0.0
    %441 = vmatpush1.msra.mxu0 %v438
    %442 = vmatprep.subr.mxu0 0.0
    %443 = vmatpush1.msra.mxu0 0.0
    %444 = vmatprep.subr.mxu0 0.0
    %445 = vmatpush1.msra.mxu0 0.0
    %446 = vmatprep.subr.mxu0 0.0
    %447 = vmatpush1.msra.mxu0 0.0
    %448 = vmatprep.subr.mxu0 0.0
    %449 = vmatpush1.msra.mxu0 0.0
    %450 = vmatprep.subr.mxu0 0.0
    %451 = vmatpush1.msra.mxu0 0.0
    %452 = vmatprep.subr.mxu0 0.0
    %453 = vmatpush1.msra.mxu0 0.0
    %454 = vmatprep.subr.mxu0 0.0
    %455 = vmatpush1.msra.mxu0 0.0
    %456 = vmatprep.subr.mxu0 0.0
    %457 = vmatpush1.msra.mxu0 0.0
    %458 = vmatprep.subr.mxu0 0.0
    %459 = vmatpush1.msra.mxu0 0.0
    %460 = vmatprep.subr.mxu0 0.0
    %461 = vmatpush1.msra.mxu0 0.0
    %462 = vmatprep.subr.mxu0 0.0
    %463 = vmatpush1.msra.mxu0 0.0
    %464 = vmatprep.subr.mxu0 0.0
    %465 = vmatpush1.msra.mxu0 0.0
    %466 = vmatprep.subr.mxu0 0.0
    %467 = vmatpush1.msra.mxu0 0.0
    %468 = vmatprep.subr.mxu0 0.0
    %469 = vmatpush1.msra.mxu0 0.0
    %470 = vmatprep.subr.mxu0 0.0
    %471 = vmatpush1.msra.mxu0 0.0
    %472 = vmatprep.subr.mxu0 0.0
    %473 = vmatpush1.msra.mxu0 0.0
    %474 = vmatprep.subr.mxu0 0.0
    %475 = vmatpush1.msra.mxu0 0.0
    %476 = vmatprep.subr.mxu0 0.0
    %477 = vmatpush1.msra.mxu0 0.0
    %478 = vmatprep.subr.mxu0 0.0
    %479 = vmatpush1.msra.mxu0 0.0
    %480 = vmatprep.subr.mxu0 0.0
    %481 = vmatpush1.msra.mxu0 0.0
    %482 = vmatprep.subr.mxu0 0.0
    %483 = vmatpush1.msra.mxu0 0.0
    %484 = vmatprep.subr.mxu0 0.0
    %485 = vmatpush1.msra.mxu0 0.0
    %486 = vmatprep.subr.mxu0 0.0
    %487 = vmatpush1.msra.mxu0 0.0
    %488 = vmatprep.subr.mxu0 0.0
    %489 = vmatpush1.msra.mxu0 0.0
    %490 = vmatprep.subr.mxu0 0.0
    %491 = vmatpush1.msra.mxu0 0.0
    %492 = vmatprep.subr.mxu0 0.0
    %493 = vmatpush1.msra.mxu0 0.0
    %494 = vmatprep.subr.mxu0 0.0
    %495 = vmatpush1.msra.mxu0 0.0
    %496 = vmatprep.subr.mxu0 0.0
    %497 = vmatpush1.msra.mxu0 0.0
    %498 = vmatprep.subr.mxu0 0.0
    %499 = vmatpush1.msra.mxu0 0.0
    %500 = vmatprep.subr.mxu0 0.0
    %501 = vmatpush1.msra.mxu0 0.0
    %502 = vmatprep.subr.mxu0 0.0
    %503 = vmatpush1.msra.mxu0 0.0
    %504 = vmatprep.mubr.f32.mxu0 0.0
    %505 = vmatmul.mubr.f32.gmra.mrb[0].mxu0 %v432
    %v506 = vpop.f32.mrb[0].mxu0
    %v507 = vadd.f32 0.0, %v506
    %v508 = vpop.f32.mrb[0].mxu0
    %509 = vmatprep.mubr.f32.mxu0 0.0
    %510 = vmatmul.mubr.f32.gmra.mrb[0].mxu0 %v435
    %v511 = vpop.f32.mrb[0].mxu0
    %v512 = vadd.f32 0.0, %v511
    %v513 = vpop.f32.mrb[0].mxu0
    %514 = vdwg.mxu0
    %v515 = vadd.f32 %v423, %v507
    %v516 = vadd.f32 %v427, %v512
    %v517 = vld [vmem:[#allocation2 + $0x6] sm:$0x1]
    %v518 = vlaneseq
    %v519 = vshrl.u32 %v518, 7
    %v520 = vsub.s32 0, %v519
    %v521 = vrot.slane %v517, %v520
    %v522 = vadd.f32 %v515, %v521
    %v523 = vadd.f32 %v516, %v521
    %v524 = vld [vmem:[#allocation2 + $0x7] sm:$0x1]
    %v525 = vld [vmem:[#allocation2 + $0x8] sm:$0x1]
    %v526 = vsel %vm128, %v522, 0.0
    %527 = vadd.xlane.f32.xlu0 %v526
    %v528 = vpop.xlane.xlu0 %527
    %v529 = vsel %vm128, %v523, 0.0
    %530 = vadd.xlane.f32.xlu0 %v529
    %v531 = vpop.xlane.xlu0 %530
    %v532 = vmul.f32 %v528, %v135
    %v533 = vmul.f32 %v531, %v135
    %v534 = vsub.f32 %v522, %v532
    %v535 = vsub.f32 %v523, %v533
    %v536 = vmul.f32 %v534, %v534
    %v537 = vmul.f32 %v535, %v535
    %v538 = vsel %vm128, %v536, 0.0
    %539 = vadd.xlane.f32.xlu0 %v538
    %v540 = vpop.xlane.xlu0 %539
    %v541 = vsel %vm128, %v537, 0.0
    %542 = vadd.xlane.f32.xlu0 %v541
    %v543 = vpop.xlane.xlu0 %542
    %v544 = vmul.f32 %v540, %v135
    %v545 = vmul.f32 %v543, %v135
    %v546 = vadd.f32 %v544, 1e-05
    %v547 = vadd.f32 %v545, 1e-05
    %v548 = vrsqrt.pop %v546
    %v549 = vrsqrt.pop %v547
    %v550 = vmul.f32 %v534, %v548
    %v551 = vmul.f32 %v535, %v549
    %v552 = vlaneseq
    %v553 = vshrl.u32 %v552, 7
    %v554 = vsub.s32 0, %v553
    %v555 = vrot.slane %v524, %v554
    %v556 = vmul.f32 %v550, %v555
    %v557 = vmul.f32 %v551, %v555
    %v558 = vlaneseq
    %v559 = vshrl.u32 %v558, 7
    %v560 = vsub.s32 0, %v559
    %v561 = vrot.slane %v525, %v560
    %v562 = vadd.f32 %v556, %v561
    %v563 = vadd.f32 %v557, %v561
    %v564 = vmax.f32 %v562, 0.0
    %v565 = vmax.f32 %v563, 0.0
    %v566 = vld [vmem:[%s2 + $0x8] sm:$0xff]
    %v567 = vld [vmem:[%s2 + $0x28] sm:$0xff]
    %v568 = vld [vmem:[%s2 + $0x48] sm:$0xff]
    %v569 = vld [vmem:[%s2 + $0x68] sm:$0xff]
    %v570 = vld [vmem:[#allocation2 + $0x9] sm:$0x1]
    %v571 = vlaneseq
    %v572 = vshrl.u32 %v571, 7
    %v573 = vsub.s32 0, %v572
    %v574 = vrot.slane %v570, %v573
    %v576 = vsel %vm128, %v564, 0
    %v579 = vsel %vm128, %v565, 0
    %581 = vmatprep.subr.mxu0 0.0
    %582 = vmatpush1.msra.mxu0 %v566
    %583 = vmatprep.subr.mxu0 0.0
    %584 = vmatpush1.msra.mxu0 %v567
    %585 = vmatprep.subr.mxu0 0.0
    %586 = vmatpush1.msra.mxu0 %v568
    %587 = vmatprep.subr.mxu0 0.0
    %588 = vmatpush1.msra.mxu0 %v569
    %589 = vmatprep.subr.mxu0 0.0
    %590 = vmatpush1.msra.mxu0 0.0
    %591 = vmatprep.subr.mxu0 0.0
    %592 = vmatpush1.msra.mxu0 0.0
    %593 = vmatprep.subr.mxu0 0.0
    %594 = vmatpush1.msra.mxu0 0.0
    %595 = vmatprep.subr.mxu0 0.0
    %596 = vmatpush1.msra.mxu0 0.0
    %597 = vmatprep.subr.mxu0 0.0
    %598 = vmatpush1.msra.mxu0 0.0
    %599 = vmatprep.subr.mxu0 0.0
    %600 = vmatpush1.msra.mxu0 0.0
    %601 = vmatprep.subr.mxu0 0.0
    %602 = vmatpush1.msra.mxu0 0.0
    %603 = vmatprep.subr.mxu0 0.0
    %604 = vmatpush1.msra.mxu0 0.0
    %605 = vmatprep.subr.mxu0 0.0
    %606 = vmatpush1.msra.mxu0 0.0
    %607 = vmatprep.subr.mxu0 0.0
    %608 = vmatpush1.msra.mxu0 0.0
    %609 = vmatprep.subr.mxu0 0.0
    %610 = vmatpush1.msra.mxu0 0.0
    %611 = vmatprep.subr.mxu0 0.0
    %612 = vmatpush1.msra.mxu0 0.0
    %613 = vmatprep.subr.mxu0 0.0
    %614 = vmatpush1.msra.mxu0 0.0
    %615 = vmatprep.subr.mxu0 0.0
    %616 = vmatpush1.msra.mxu0 0.0
    %617 = vmatprep.subr.mxu0 0.0
    %618 = vmatpush1.msra.mxu0 0.0
    %619 = vmatprep.subr.mxu0 0.0
    %620 = vmatpush1.msra.mxu0 0.0
    %621 = vmatprep.subr.mxu0 0.0
    %622 = vmatpush1.msra.mxu0 0.0
    %623 = vmatprep.subr.mxu0 0.0
    %624 = vmatpush1.msra.mxu0 0.0
    %625 = vmatprep.subr.mxu0 0.0
    %626 = vmatpush1.msra.mxu0 0.0
    %627 = vmatprep.subr.mxu0 0.0
    %628 = vmatpush1.msra.mxu0 0.0
    %629 = vmatprep.subr.mxu0 0.0
    %630 = vmatpush1.msra.mxu0 0.0
    %631 = vmatprep.subr.mxu0 0.0
    %632 = vmatpush1.msra.mxu0 0.0
    %633 = vmatprep.subr.mxu0 0.0
    %634 = vmatpush1.msra.mxu0 0.0
    %635 = vmatprep.subr.mxu0 0.0
    %636 = vmatpush1.msra.mxu0 0.0
    %637 = vmatprep.subr.mxu0 0.0
    %638 = vmatpush1.msra.mxu0 0.0
    %639 = vmatprep.subr.mxu0 0.0
    %640 = vmatpush1.msra.mxu0 0.0
    %641 = vmatprep.subr.mxu0 0.0
    %642 = vmatpush1.msra.mxu0 0.0
    %643 = vmatprep.subr.mxu0 0.0
    %644 = vmatpush1.msra.mxu0 0.0
    %645 = vmatprep.mubr.f32.mxu0 0.0
    %646 = vmatmul.mubr.f32.gmra.mrb[0].mxu0 %v576
    %v647 = vpop.f32.mrb[0].mxu0
    %v648 = vadd.f32 %v574, %v647
    %v649 = vpop.f32.mrb[0].mxu0
    %650 = vmatprep.mubr.f32.mxu0 0.0
    %651 = vmatmul.mubr.f32.gmra.mrb[0].mxu0 %v579
    %v652 = vpop.f32.mrb[0].mxu0
    %v653 = vadd.f32 %v574, %v652
    %v654 = vpop.f32.mrb[0].mxu0
    %655 = vdwg.mxu0
    %v656 = vld [vmem:[#allocation2 + $0xa] sm:$0x1]
    %v657 = vld [vmem:[#allocation2 + $0xb] sm:$0x1]
    %vm658 = vcmask 64512
    %v659 = vsel %vm658, %v648, 0.0
    %660 = vadd.xlane.f32.xlu0 %v659
    %v661 = vpop.xlane.xlu0 %660
    %v662 = vsel %vm658, %v653, 0.0
    %663 = vadd.xlane.f32.xlu0 %v662
    %v664 = vpop.xlane.xlu0 %663
    %v665 = vrcp.pop 8.0
    %v666 = vmul.f32 %v661, %v665
    %v667 = vmul.f32 %v664, %v665
    %v668 = vsub.f32 %v648, %v666
    %v669 = vsub.f32 %v653, %v667
    %v670 = vmul.f32 %v668, %v668
    %v671 = vmul.f32 %v669, %v669
    %v672 = vsel %vm658, %v670, 0.0
    %673 = vadd.xlane.f32.xlu0 %v672
    %v674 = vpop.xlane.xlu0 %673
    %v675 = vsel %vm658, %v671, 0.0
    %676 = vadd.xlane.f32.xlu0 %v675
    %v677 = vpop.xlane.xlu0 %676
    %v678 = vmul.f32 %v674, %v665
    %v679 = vmul.f32 %v677, %v665
    %v680 = vadd.f32 %v678, 1e-05
    %v681 = vadd.f32 %v679, 1e-05
    %v682 = vrsqrt.pop %v680
    %v683 = vrsqrt.pop %v681
    %v684 = vmul.f32 %v668, %v682
    %v685 = vmul.f32 %v669, %v683
    %v686 = vlaneseq
    %v687 = vshrl.u32 %v686, 7
    %v688 = vsub.s32 0, %v687
    %v689 = vrot.slane %v656, %v688
    %v690 = vmul.f32 %v684, %v689
    %v691 = vmul.f32 %v685, %v689
    %v692 = vlaneseq
    %v693 = vshrl.u32 %v692, 7
    %v694 = vsub.s32 0, %v693
    %v695 = vrot.slane %v657, %v694
    %v696 = vadd.f32 %v690, %v695
    %v697 = vadd.f32 %v691, %v695
    %v698 = vmax.f32 %v696, 0.0
    %v699 = vmax.f32 %v697, 0.0
    %v700 = vsel %vm658, %v698, -inf
    %v701 = vrot.slane %v700, 4
    %v702 = vmax.f32 %v700, %v701
    %v703 = vrot.slane %v702, 2
    %v704 = vmax.f32 %v702, %v703
    %v705 = vrot.slane %v704, 1
    %v706 = vmax.f32 %v704, %v705
    %v707 = vsel %vm658, %v699, -inf
    %v708 = vrot.slane %v707, 4
    %v709 = vmax.f32 %v707, %v708
    %v710 = vrot.slane %v709, 2
    %v711 = vmax.f32 %v709, %v710
    %v712 = vrot.slane %v711, 1
    %v713 = vmax.f32 %v711, %v712
    %v714 = vld [vmem:[%s1 + $0x18] sm:$0xff]
    %v717 = vsel %vm320, %v713, %v706
    %v718 = vsel %vm658, %v717, 0
    %720 = vmatprep.subr.mxu0 0.0
    %721 = vmatpush1.msra.mxu0 %v714
    %722 = vmatprep.subr.mxu0 0.0
    %723 = vmatpush1.msra.mxu0 0.0
    %724 = vmatprep.subr.mxu0 0.0
    %725 = vmatpush1.msra.mxu0 0.0
    %726 = vmatprep.subr.mxu0 0.0
    %727 = vmatpush1.msra.mxu0 0.0
    %728 = vmatprep.subr.mxu0 0.0
    %729 = vmatpush1.msra.mxu0 0.0
    %730 = vmatprep.subr.mxu0 0.0
    %731 = vmatpush1.msra.mxu0 0.0
    %732 = vmatprep.subr.mxu0 0.0
    %733 = vmatpush1.msra.mxu0 0.0
    %734 = vmatprep.subr.mxu0 0.0
    %735 = vmatpush1.msra.mxu0 0.0
    %736 = vmatprep.subr.mxu0 0.0
    %737 = vmatpush1.msra.mxu0 0.0
    %738 = vmatprep.subr.mxu0 0.0
    %739 = vmatpush1.msra.mxu0 0.0
    %740 = vmatprep.subr.mxu0 0.0
    %741 = vmatpush1.msra.mxu0 0.0
    %742 = vmatprep.subr.mxu0 0.0
    %743 = vmatpush1.msra.mxu0 0.0
    %744 = vmatprep.subr.mxu0 0.0
    %745 = vmatpush1.msra.mxu0 0.0
    %746 = vmatprep.subr.mxu0 0.0
    %747 = vmatpush1.msra.mxu0 0.0
    %748 = vmatprep.subr.mxu0 0.0
    %749 = vmatpush1.msra.mxu0 0.0
    %750 = vmatprep.subr.mxu0 0.0
    %751 = vmatpush1.msra.mxu0 0.0
    %752 = vmatprep.subr.mxu0 0.0
    %753 = vmatpush1.msra.mxu0 0.0
    %754 = vmatprep.subr.mxu0 0.0
    %755 = vmatpush1.msra.mxu0 0.0
    %756 = vmatprep.subr.mxu0 0.0
    %757 = vmatpush1.msra.mxu0 0.0
    %758 = vmatprep.subr.mxu0 0.0
    %759 = vmatpush1.msra.mxu0 0.0
    %760 = vmatprep.subr.mxu0 0.0
    %761 = vmatpush1.msra.mxu0 0.0
    %762 = vmatprep.subr.mxu0 0.0
    %763 = vmatpush1.msra.mxu0 0.0
    %764 = vmatprep.subr.mxu0 0.0
    %765 = vmatpush1.msra.mxu0 0.0
    %766 = vmatprep.subr.mxu0 0.0
    %767 = vmatpush1.msra.mxu0 0.0
    %768 = vmatprep.subr.mxu0 0.0
    %769 = vmatpush1.msra.mxu0 0.0
    %770 = vmatprep.subr.mxu0 0.0
    %771 = vmatpush1.msra.mxu0 0.0
    %772 = vmatprep.subr.mxu0 0.0
    %773 = vmatpush1.msra.mxu0 0.0
    %774 = vmatprep.subr.mxu0 0.0
    %775 = vmatpush1.msra.mxu0 0.0
    %776 = vmatprep.subr.mxu0 0.0
    %777 = vmatpush1.msra.mxu0 0.0
    %778 = vmatprep.subr.mxu0 0.0
    %779 = vmatpush1.msra.mxu0 0.0
    %780 = vmatprep.subr.mxu0 0.0
    %781 = vmatpush1.msra.mxu0 0.0
    %782 = vmatprep.subr.mxu0 0.0
    %783 = vmatpush1.msra.mxu0 0.0
    %784 = vmatprep.mubr.f32.mxu0 0.0
    %785 = vmatmul.mubr.f32.gmra.mrb[0].mxu0 %v718
    %v786 = vpop.f32.mrb[0].mxu0
    %v787 = vadd.f32 0.0, %v786
    %v788 = vpop.f32.mrb[0].mxu0
    %789 = vdwg.mxu0
    %v792 = vunpack.c.l.s4 1966171168
    %v793 = vunpack.c.0.s8 %v792
    %v794 = vlaneseq
    %v795 = vshrl.u32 %v794, 7
    %v796 = vsub.s32 %v793, %v795
    %v797 = vrot.slane %v787, %v796
    %v798 = vcombine.high %v797, %v797
    %v800 = vunpack.c.l.s4 1966171168
    %v801 = vunpack.c.0.s8 %v800
    %v802 = vlaneseq
    %v803 = vshrl.u32 %v802, 7
    %v804 = vsub.s32 %v801, %v803
    %v805 = vrot.slane %v797, %v804
    %v807 = vunpack.c.l.s4 1966171168
    %v808 = vunpack.c.0.s8 %v807
    %v809 = vlaneseq
    %v810 = vshrl.u32 %v809, 7
    %v811 = vsub.s32 %v808, %v810
    %v812 = vrot.slane %v798, %v811
    %v813 = vlaneseq
    %v814 = vshrl.u32 %v813, 7
    %v815 = vsub.s32 0, %v814
    %v816 = vrot.slane %v805, %v815
    %v817 = vlaneseq
    %v818 = vshrl.u32 %v817, 7
    %v819 = vsub.s32 0, %v818
    %v820 = vrot.slane %v812, %v819
    %v823 = vld [vmem:[%s1 + $0x20] sm:$0xff]
    %v825 = vsel %vm658, %v698, 0
    %v828 = vsel %vm658, %v699, 0
    %830 = vmatprep.subr.mxu0 0.0
    %831 = vmatpush1.msra.mxu0 %v823
    %832 = vmatprep.subr.mxu0 0.0
    %833 = vmatpush1.msra.mxu0 0.0
    %834 = vmatprep.subr.mxu0 0.0
    %835 = vmatpush1.msra.mxu0 0.0
    %836 = vmatprep.subr.mxu0 0.0
    %837 = vmatpush1.msra.mxu0 0.0
    %838 = vmatprep.subr.mxu0 0.0
    %839 = vmatpush1.msra.mxu0 0.0
    %840 = vmatprep.subr.mxu0 0.0
    %841 = vmatpush1.msra.mxu0 0.0
    %842 = vmatprep.subr.mxu0 0.0
    %843 = vmatpush1.msra.mxu0 0.0
    %844 = vmatprep.subr.mxu0 0.0
    %845 = vmatpush1.msra.mxu0 0.0
    %846 = vmatprep.subr.mxu0 0.0
    %847 = vmatpush1.msra.mxu0 0.0
    %848 = vmatprep.subr.mxu0 0.0
    %849 = vmatpush1.msra.mxu0 0.0
    %850 = vmatprep.subr.mxu0 0.0
    %851 = vmatpush1.msra.mxu0 0.0
    %852 = vmatprep.subr.mxu0 0.0
    %853 = vmatpush1.msra.mxu0 0.0
    %854 = vmatprep.subr.mxu0 0.0
    %855 = vmatpush1.msra.mxu0 0.0
    %856 = vmatprep.subr.mxu0 0.0
    %857 = vmatpush1.msra.mxu0 0.0
    %858 = vmatprep.subr.mxu0 0.0
    %859 = vmatpush1.msra.mxu0 0.0
    %860 = vmatprep.subr.mxu0 0.0
    %861 = vmatpush1.msra.mxu0 0.0
    %862 = vmatprep.subr.mxu0 0.0
    %863 = vmatpush1.msra.mxu0 0.0
    %864 = vmatprep.subr.mxu0 0.0
    %865 = vmatpush1.msra.mxu0 0.0
    %866 = vmatprep.subr.mxu0 0.0
    %867 = vmatpush1.msra.mxu0 0.0
    %868 = vmatprep.subr.mxu0 0.0
    %869 = vmatpush1.msra.mxu0 0.0
    %870 = vmatprep.subr.mxu0 0.0
    %871 = vmatpush1.msra.mxu0 0.0
    %872 = vmatprep.subr.mxu0 0.0
    %873 = vmatpush1.msra.mxu0 0.0
    %874 = vmatprep.subr.mxu0 0.0
    %875 = vmatpush1.msra.mxu0 0.0
    %876 = vmatprep.subr.mxu0 0.0
    %877 = vmatpush1.msra.mxu0 0.0
    %878 = vmatprep.subr.mxu0 0.0
    %879 = vmatpush1.msra.mxu0 0.0
    %880 = vmatprep.subr.mxu0 0.0
    %881 = vmatpush1.msra.mxu0 0.0
    %882 = vmatprep.subr.mxu0 0.0
    %883 = vmatpush1.msra.mxu0 0.0
    %884 = vmatprep.subr.mxu0 0.0
    %885 = vmatpush1.msra.mxu0 0.0
    %886 = vmatprep.subr.mxu0 0.0
    %887 = vmatpush1.msra.mxu0 0.0
    %888 = vmatprep.subr.mxu0 0.0
    %889 = vmatpush1.msra.mxu0 0.0
    %890 = vmatprep.subr.mxu0 0.0
    %891 = vmatpush1.msra.mxu0 0.0
    %892 = vmatprep.subr.mxu0 0.0
    %893 = vmatpush1.msra.mxu0 0.0
    %894 = vmatprep.mubr.f32.mxu0 0.0
    %895 = vmatmul.mubr.f32.gmra.mrb[0].mxu0 %v825
    %v896 = vpop.f32.mrb[0].mxu0
    %v897 = vadd.f32 0.0, %v896
    %v898 = vpop.f32.mrb[0].mxu0
    %899 = vmatprep.mubr.f32.mxu0 0.0
    %900 = vmatmul.mubr.f32.gmra.mrb[0].mxu0 %v828
    %v901 = vpop.f32.mrb[0].mxu0
    %v902 = vadd.f32 0.0, %v901
    %v903 = vpop.f32.mrb[0].mxu0
    %904 = vdwg.mxu0
    %v905 = vadd.f32 %v816, %v897
    %v906 = vadd.f32 %v820, %v902
    %v907 = vld [vmem:[#allocation2 + $0xc] sm:$0x1]
    %v908 = vlaneseq
    %v909 = vshrl.u32 %v908, 7
    %v910 = vsub.s32 0, %v909
    %v911 = vrot.slane %v907, %v910
    %v912 = vadd.f32 %v905, %v911
    %v913 = vadd.f32 %v906, %v911
    %v914 = vld [vmem:[#allocation2 + $0xd] sm:$0x1]
    %v915 = vld [vmem:[#allocation2 + $0xe] sm:$0x1]
    %v916 = vsel %vm128, %v912, 0.0
    %917 = vadd.xlane.f32.xlu0 %v916
    %v918 = vpop.xlane.xlu0 %917
    %v919 = vsel %vm128, %v913, 0.0
    %920 = vadd.xlane.f32.xlu0 %v919
    %v921 = vpop.xlane.xlu0 %920
    %v922 = vmul.f32 %v918, %v135
    %v923 = vmul.f32 %v921, %v135
    %v924 = vsub.f32 %v912, %v922
    %v925 = vsub.f32 %v913, %v923
    %v926 = vmul.f32 %v924, %v924
    %v927 = vmul.f32 %v925, %v925
    %v928 = vsel %vm128, %v926, 0.0
    %929 = vadd.xlane.f32.xlu0 %v928
    %v930 = vpop.xlane.xlu0 %929
    %v931 = vsel %vm128, %v927, 0.0
    %932 = vadd.xlane.f32.xlu0 %v931
    %v933 = vpop.xlane.xlu0 %932
    %v934 = vmul.f32 %v930, %v135
    %v935 = vmul.f32 %v933, %v135
    %v936 = vadd.f32 %v934, 1e-05
    %v937 = vadd.f32 %v935, 1e-05
    %v938 = vrsqrt.pop %v936
    %v939 = vrsqrt.pop %v937
    %v940 = vmul.f32 %v924, %v938
    %v941 = vmul.f32 %v925, %v939
    %v942 = vlaneseq
    %v943 = vshrl.u32 %v942, 7
    %v944 = vsub.s32 0, %v943
    %v945 = vrot.slane %v914, %v944
    %v946 = vmul.f32 %v940, %v945
    %v947 = vmul.f32 %v941, %v945
    %v948 = vlaneseq
    %v949 = vshrl.u32 %v948, 7
    %v950 = vsub.s32 0, %v949
    %v951 = vrot.slane %v915, %v950
    %v952 = vadd.f32 %v946, %v951
    %v953 = vadd.f32 %v947, %v951
    %v954 = vmax.f32 %v952, 0.0
    %v955 = vmax.f32 %v953, 0.0
    %v956 = vld [vmem:[%s2 + $0x10] sm:$0xff]
    %v957 = vld [vmem:[%s2 + $0x30] sm:$0xff]
    %v958 = vld [vmem:[%s2 + $0x50] sm:$0xff]
    %v959 = vld [vmem:[%s2 + $0x70] sm:$0xff]
    %v960 = vld [vmem:[#allocation2 + $0xf] sm:$0x1]
    %v961 = vlaneseq
    %v962 = vshrl.u32 %v961, 7
    %v963 = vsub.s32 0, %v962
    %v964 = vrot.slane %v960, %v963
    %v966 = vsel %vm128, %v954, 0
    %v969 = vsel %vm128, %v955, 0
    %971 = vmatprep.subr.mxu0 0.0
    %972 = vmatpush1.msra.mxu0 %v956
    %973 = vmatprep.subr.mxu0 0.0
    %974 = vmatpush1.msra.mxu0 %v957
    %975 = vmatprep.subr.mxu0 0.0
    %976 = vmatpush1.msra.mxu0 %v958
    %977 = vmatprep.subr.mxu0 0.0
    %978 = vmatpush1.msra.mxu0 %v959
    %979 = vmatprep.subr.mxu0 0.0
    %980 = vmatpush1.msra.mxu0 0.0
    %981 = vmatprep.subr.mxu0 0.0
    %982 = vmatpush1.msra.mxu0 0.0
    %983 = vmatprep.subr.mxu0 0.0
    %984 = vmatpush1.msra.mxu0 0.0
    %985 = vmatprep.subr.mxu0 0.0
    %986 = vmatpush1.msra.mxu0 0.0
    %987 = vmatprep.subr.mxu0 0.0
    %988 = vmatpush1.msra.mxu0 0.0
    %989 = vmatprep.subr.mxu0 0.0
    %990 = vmatpush1.msra.mxu0 0.0
    %991 = vmatprep.subr.mxu0 0.0
    %992 = vmatpush1.msra.mxu0 0.0
    %993 = vmatprep.subr.mxu0 0.0
    %994 = vmatpush1.msra.mxu0 0.0
    %995 = vmatprep.subr.mxu0 0.0
    %996 = vmatpush1.msra.mxu0 0.0
    %997 = vmatprep.subr.mxu0 0.0
    %998 = vmatpush1.msra.mxu0 0.0
    %999 = vmatprep.subr.mxu0 0.0
    %1000 = vmatpush1.msra.mxu0 0.0
    %1001 = vmatprep.subr.mxu0 0.0
    %1002 = vmatpush1.msra.mxu0 0.0
    %1003 = vmatprep.subr.mxu0 0.0
    %1004 = vmatpush1.msra.mxu0 0.0
    %1005 = vmatprep.subr.mxu0 0.0
    %1006 = vmatpush1.msra.mxu0 0.0
    %1007 = vmatprep.subr.mxu0 0.0
    %1008 = vmatpush1.msra.mxu0 0.0
    %1009 = vmatprep.subr.mxu0 0.0
    %1010 = vmatpush1.msra.mxu0 0.0
    %1011 = vmatprep.subr.mxu0 0.0
    %1012 = vmatpush1.msra.mxu0 0.0
    %1013 = vmatprep.subr.mxu0 0.0
    %1014 = vmatpush1.msra.mxu0 0.0
    %1015 = vmatprep.subr.mxu0 0.0
    %1016 = vmatpush1.msra.mxu0 0.0
    %1017 = vmatprep.subr.mxu0 0.0
    %1018 = vmatpush1.msra.mxu0 0.0
    %1019 = vmatprep.subr.mxu0 0.0
    %1020 = vmatpush1.msra.mxu0 0.0
    %1021 = vmatprep.subr.mxu0 0.0
    %1022 = vmatpush1.msra.mxu0 0.0
    %1023 = vmatprep.subr.mxu0 0.0
    %1024 = vmatpush1.msra.mxu0 0.0
    %1025 = vmatprep.subr.mxu0 0.0
    %1026 = vmatpush1.msra.mxu0 0.0
    %1027 = vmatprep.subr.mxu0 0.0
    %1028 = vmatpush1.msra.mxu0 0.0
    %1029 = vmatprep.subr.mxu0 0.0
    %1030 = vmatpush1.msra.mxu0 0.0
    %1031 = vmatprep.subr.mxu0 0.0
    %1032 = vmatpush1.msra.mxu0 0.0
    %1033 = vmatprep.subr.mxu0 0.0
    %1034 = vmatpush1.msra.mxu0 0.0
    %1035 = vmatprep.mubr.f32.mxu0 0.0
    %1036 = vmatmul.mubr.f32.gmra.mrb[0].mxu0 %v966
    %v1037 = vpop.f32.mrb[0].mxu0
    %v1038 = vadd.f32 %v964, %v1037
    %v1039 = vpop.f32.mrb[0].mxu0
    %1040 = vmatprep.mubr.f32.mxu0 0.0
    %1041 = vmatmul.mubr.f32.gmra.mrb[0].mxu0 %v969
    %v1042 = vpop.f32.mrb[0].mxu0
    %v1043 = vadd.f32 %v964, %v1042
    %v1044 = vpop.f32.mrb[0].mxu0
    %1045 = vdwg.mxu0
    %v1046 = vld [vmem:[#allocation2 + $0x10] sm:$0x1]
    %v1047 = vld [vmem:[#allocation2 + $0x11] sm:$0x1]
    %vm1048 = vcmask 130048
    %v1049 = vsel %vm1048, %v1038, 0.0
    %1050 = vadd.xlane.f32.xlu0 %v1049
    %v1051 = vpop.xlane.xlu0 %1050
    %v1052 = vsel %vm1048, %v1043, 0.0
    %1053 = vadd.xlane.f32.xlu0 %v1052
    %v1054 = vpop.xlane.xlu0 %1053
    %v1055 = vrcp.pop 16.0
    %v1056 = vmul.f32 %v1051, %v1055
    %v1057 = vmul.f32 %v1054, %v1055
    %v1058 = vsub.f32 %v1038, %v1056
    %v1059 = vsub.f32 %v1043, %v1057
    %v1060 = vmul.f32 %v1058, %v1058
    %v1061 = vmul.f32 %v1059, %v1059
    %v1062 = vsel %vm1048, %v1060, 0.0
    %1063 = vadd.xlane.f32.xlu0 %v1062
    %v1064 = vpop.xlane.xlu0 %1063
    %v1065 = vsel %vm1048, %v1061, 0.0
    %1066 = vadd.xlane.f32.xlu0 %v1065
    %v1067 = vpop.xlane.xlu0 %1066
    %v1068 = vmul.f32 %v1064, %v1055
    %v1069 = vmul.f32 %v1067, %v1055
    %v1070 = vadd.f32 %v1068, 1e-05
    %v1071 = vadd.f32 %v1069, 1e-05
    %v1072 = vrsqrt.pop %v1070
    %v1073 = vrsqrt.pop %v1071
    %v1074 = vmul.f32 %v1058, %v1072
    %v1075 = vmul.f32 %v1059, %v1073
    %v1076 = vlaneseq
    %v1077 = vshrl.u32 %v1076, 7
    %v1078 = vsub.s32 0, %v1077
    %v1079 = vrot.slane %v1046, %v1078
    %v1080 = vmul.f32 %v1074, %v1079
    %v1081 = vmul.f32 %v1075, %v1079
    %v1082 = vlaneseq
    %v1083 = vshrl.u32 %v1082, 7
    %v1084 = vsub.s32 0, %v1083
    %v1085 = vrot.slane %v1047, %v1084
    %v1086 = vadd.f32 %v1080, %v1085
    %v1087 = vadd.f32 %v1081, %v1085
    %v1088 = vmax.f32 %v1086, 0.0
    %v1089 = vmax.f32 %v1087, 0.0
    %v1090 = vsel %vm1048, %v1088, -inf
    %v1091 = vrot.slane %v1090, 4
    %v1092 = vmax.f32 %v1090, %v1091
    %v1093 = vrot.slane %v1092, 2
    %v1094 = vmax.f32 %v1092, %v1093
    %v1095 = vrot.slane %v1094, 1
    %v1096 = vmax.f32 %v1094, %v1095
    %v1097 = vsel %vm1048, %v1089, -inf
    %v1098 = vrot.slane %v1097, 4
    %v1099 = vmax.f32 %v1097, %v1098
    %v1100 = vrot.slane %v1099, 2
    %v1101 = vmax.f32 %v1099, %v1100
    %v1102 = vrot.slane %v1101, 1
    %v1103 = vmax.f32 %v1101, %v1102
    %v1104 = vld [vmem:[%s1 + $0x28] sm:$0xff]
    %v1105 = vld [vmem:[%s1 + $0x30] sm:$0xff]
    %v1108 = vsel %vm320, %v1103, %v1096
    %v1109 = vsel %vm1048, %v1108, 0
    %1111 = vmatprep.subr.mxu0 0.0
    %1112 = vmatpush1.msra.mxu0 %v1104
    %1113 = vmatprep.subr.mxu0 0.0
    %1114 = vmatpush1.msra.mxu0 %v1105
    %1115 = vmatprep.subr.mxu0 0.0
    %1116 = vmatpush1.msra.mxu0 0.0
    %1117 = vmatprep.subr.mxu0 0.0
    %1118 = vmatpush1.msra.mxu0 0.0
    %1119 = vmatprep.subr.mxu0 0.0
    %1120 = vmatpush1.msra.mxu0 0.0
    %1121 = vmatprep.subr.mxu0 0.0
    %1122 = vmatpush1.msra.mxu0 0.0
    %1123 = vmatprep.subr.mxu0 0.0
    %1124 = vmatpush1.msra.mxu0 0.0
    %1125 = vmatprep.subr.mxu0 0.0
    %1126 = vmatpush1.msra.mxu0 0.0
    %1127 = vmatprep.subr.mxu0 0.0
    %1128 = vmatpush1.msra.mxu0 0.0
    %1129 = vmatprep.subr.mxu0 0.0
    %1130 = vmatpush1.msra.mxu0 0.0
    %1131 = vmatprep.subr.mxu0 0.0
    %1132 = vmatpush1.msra.mxu0 0.0
    %1133 = vmatprep.subr.mxu0 0.0
    %1134 = vmatpush1.msra.mxu0 0.0
    %1135 = vmatprep.subr.mxu0 0.0
    %1136 = vmatpush1.msra.mxu0 0.0
    %1137 = vmatprep.subr.mxu0 0.0
    %1138 = vmatpush1.msra.mxu0 0.0
    %1139 = vmatprep.subr.mxu0 0.0
    %1140 = vmatpush1.msra.mxu0 0.0
    %1141 = vmatprep.subr.mxu0 0.0
    %1142 = vmatpush1.msra.mxu0 0.0
    %1143 = vmatprep.subr.mxu0 0.0
    %1144 = vmatpush1.msra.mxu0 0.0
    %1145 = vmatprep.subr.mxu0 0.0
    %1146 = vmatpush1.msra.mxu0 0.0
    %1147 = vmatprep.subr.mxu0 0.0
    %1148 = vmatpush1.msra.mxu0 0.0
    %1149 = vmatprep.subr.mxu0 0.0
    %1150 = vmatpush1.msra.mxu0 0.0
    %1151 = vmatprep.subr.mxu0 0.0
    %1152 = vmatpush1.msra.mxu0 0.0
    %1153 = vmatprep.subr.mxu0 0.0
    %1154 = vmatpush1.msra.mxu0 0.0
    %1155 = vmatprep.subr.mxu0 0.0
    %1156 = vmatpush1.msra.mxu0 0.0
    %1157 = vmatprep.subr.mxu0 0.0
    %1158 = vmatpush1.msra.mxu0 0.0
    %1159 = vmatprep.subr.mxu0 0.0
    %1160 = vmatpush1.msra.mxu0 0.0
    %1161 = vmatprep.subr.mxu0 0.0
    %1162 = vmatpush1.msra.mxu0 0.0
    %1163 = vmatprep.subr.mxu0 0.0
    %1164 = vmatpush1.msra.mxu0 0.0
    %1165 = vmatprep.subr.mxu0 0.0
    %1166 = vmatpush1.msra.mxu0 0.0
    %1167 = vmatprep.subr.mxu0 0.0
    %1168 = vmatpush1.msra.mxu0 0.0
    %1169 = vmatprep.subr.mxu0 0.0
    %1170 = vmatpush1.msra.mxu0 0.0
    %1171 = vmatprep.subr.mxu0 0.0
    %1172 = vmatpush1.msra.mxu0 0.0
    %1173 = vmatprep.subr.mxu0 0.0
    %1174 = vmatpush1.msra.mxu0 0.0
    %1175 = vmatprep.mubr.f32.mxu0 0.0
    %1176 = vmatmul.mubr.f32.gmra.mrb[0].mxu0 %v1109
    %v1177 = vpop.f32.mrb[0].mxu0
    %v1178 = vadd.f32 0.0, %v1177
    %v1179 = vpop.f32.mrb[0].mxu0
    %1180 = vdwg.mxu0
    %v1183 = vunpack.c.l.s4 1966171168
    %v1184 = vunpack.c.0.s8 %v1183
    %v1185 = vlaneseq
    %v1186 = vshrl.u32 %v1185, 7
    %v1187 = vsub.s32 %v1184, %v1186
    %v1188 = vrot.slane %v1178, %v1187
    %v1189 = vcombine.high %v1188, %v1188
    %v1191 = vunpack.c.l.s4 1966171168
    %v1192 = vunpack.c.0.s8 %v1191
    %v1193 = vlaneseq
    %v1194 = vshrl.u32 %v1193, 7
    %v1195 = vsub.s32 %v1192, %v1194
    %v1196 = vrot.slane %v1188, %v1195
    %v1198 = vunpack.c.l.s4 1966171168
    %v1199 = vunpack.c.0.s8 %v1198
    %v1200 = vlaneseq
    %v1201 = vshrl.u32 %v1200, 7
    %v1202 = vsub.s32 %v1199, %v1201
    %v1203 = vrot.slane %v1189, %v1202
    %v1204 = vlaneseq
    %v1205 = vshrl.u32 %v1204, 7
    %v1206 = vsub.s32 0, %v1205
    %v1207 = vrot.slane %v1196, %v1206
    %v1208 = vlaneseq
    %v1209 = vshrl.u32 %v1208, 7
    %v1210 = vsub.s32 0, %v1209
    %v1211 = vrot.slane %v1203, %v1210
    %v1214 = vld [vmem:[%s1 + $0x38] sm:$0xff]
    %v1215 = vld [vmem:[%s1 + $0x40] sm:$0xff]
    %v1217 = vsel %vm1048, %v1088, 0
    %v1220 = vsel %vm1048, %v1089, 0
    %1222 = vmatprep.subr.mxu0 0.0
    %1223 = vmatpush1.msra.mxu0 %v1214
    %1224 = vmatprep.subr.mxu0 0.0
    %1225 = vmatpush1.msra.mxu0 %v1215
    %1226 = vmatprep.subr.mxu0 0.0
    %1227 = vmatpush1.msra.mxu0 0.0
    %1228 = vmatprep.subr.mxu0 0.0
    %1229 = vmatpush1.msra.mxu0 0.0
    %1230 = vmatprep.subr.mxu0 0.0
    %1231 = vmatpush1.msra.mxu0 0.0
    %1232 = vmatprep.subr.mxu0 0.0
    %1233 = vmatpush1.msra.mxu0 0.0
    %1234 = vmatprep.subr.mxu0 0.0
    %1235 = vmatpush1.msra.mxu0 0.0
    %1236 = vmatprep.subr.mxu0 0.0
    %1237 = vmatpush1.msra.mxu0 0.0
    %1238 = vmatprep.subr.mxu0 0.0
    %1239 = vmatpush1.msra.mxu0 0.0
    %1240 = vmatprep.subr.mxu0 0.0
    %1241 = vmatpush1.msra.mxu0 0.0
    %1242 = vmatprep.subr.mxu0 0.0
    %1243 = vmatpush1.msra.mxu0 0.0
    %1244 = vmatprep.subr.mxu0 0.0
    %1245 = vmatpush1.msra.mxu0 0.0
    %1246 = vmatprep.subr.mxu0 0.0
    %1247 = vmatpush1.msra.mxu0 0.0
    %1248 = vmatprep.subr.mxu0 0.0
    %1249 = vmatpush1.msra.mxu0 0.0
    %1250 = vmatprep.subr.mxu0 0.0
    %1251 = vmatpush1.msra.mxu0 0.0
    %1252 = vmatprep.subr.mxu0 0.0
    %1253 = vmatpush1.msra.mxu0 0.0
    %1254 = vmatprep.subr.mxu0 0.0
    %1255 = vmatpush1.msra.mxu0 0.0
    %1256 = vmatprep.subr.mxu0 0.0
    %1257 = vmatpush1.msra.mxu0 0.0
    %1258 = vmatprep.subr.mxu0 0.0
    %1259 = vmatpush1.msra.mxu0 0.0
    %1260 = vmatprep.subr.mxu0 0.0
    %1261 = vmatpush1.msra.mxu0 0.0
    %1262 = vmatprep.subr.mxu0 0.0
    %1263 = vmatpush1.msra.mxu0 0.0
    %1264 = vmatprep.subr.mxu0 0.0
    %1265 = vmatpush1.msra.mxu0 0.0
    %1266 = vmatprep.subr.mxu0 0.0
    %1267 = vmatpush1.msra.mxu0 0.0
    %1268 = vmatprep.subr.mxu0 0.0
    %1269 = vmatpush1.msra.mxu0 0.0
    %1270 = vmatprep.subr.mxu0 0.0
    %1271 = vmatpush1.msra.mxu0 0.0
    %1272 = vmatprep.subr.mxu0 0.0
    %1273 = vmatpush1.msra.mxu0 0.0
    %1274 = vmatprep.subr.mxu0 0.0
    %1275 = vmatpush1.msra.mxu0 0.0
    %1276 = vmatprep.subr.mxu0 0.0
    %1277 = vmatpush1.msra.mxu0 0.0
    %1278 = vmatprep.subr.mxu0 0.0
    %1279 = vmatpush1.msra.mxu0 0.0
    %1280 = vmatprep.subr.mxu0 0.0
    %1281 = vmatpush1.msra.mxu0 0.0
    %1282 = vmatprep.subr.mxu0 0.0
    %1283 = vmatpush1.msra.mxu0 0.0
    %1284 = vmatprep.subr.mxu0 0.0
    %1285 = vmatpush1.msra.mxu0 0.0
    %1286 = vmatprep.mubr.f32.mxu0 0.0
    %1287 = vmatmul.mubr.f32.gmra.mrb[0].mxu0 %v1217
    %v1288 = vpop.f32.mrb[0].mxu0
    %v1289 = vadd.f32 0.0, %v1288
    %v1290 = vpop.f32.mrb[0].mxu0
    %1291 = vmatprep.mubr.f32.mxu0 0.0
    %1292 = vmatmul.mubr.f32.gmra.mrb[0].mxu0 %v1220
    %v1293 = vpop.f32.mrb[0].mxu0
    %v1294 = vadd.f32 0.0, %v1293
    %v1295 = vpop.f32.mrb[0].mxu0
    %1296 = vdwg.mxu0
    %v1297 = vadd.f32 %v1207, %v1289
    %v1298 = vadd.f32 %v1211, %v1294
    %v1299 = vld [vmem:[#allocation2 + $0x12] sm:$0x1]
    %v1300 = vlaneseq
    %v1301 = vshrl.u32 %v1300, 7
    %v1302 = vsub.s32 0, %v1301
    %v1303 = vrot.slane %v1299, %v1302
    %v1304 = vadd.f32 %v1297, %v1303
    %v1305 = vadd.f32 %v1298, %v1303
    %v1306 = vld [vmem:[#allocation2 + $0x13] sm:$0x1]
    %v1307 = vld [vmem:[#allocation2 + $0x14] sm:$0x1]
    %v1308 = vsel %vm128, %v1304, 0.0
    %1309 = vadd.xlane.f32.xlu0 %v1308
    %v1310 = vpop.xlane.xlu0 %1309
    %v1311 = vsel %vm128, %v1305, 0.0
    %1312 = vadd.xlane.f32.xlu0 %v1311
    %v1313 = vpop.xlane.xlu0 %1312
    %v1314 = vmul.f32 %v1310, %v135
    %v1315 = vmul.f32 %v1313, %v135
    %v1316 = vsub.f32 %v1304, %v1314
    %v1317 = vsub.f32 %v1305, %v1315
    %v1318 = vmul.f32 %v1316, %v1316
    %v1319 = vmul.f32 %v1317, %v1317
    %v1320 = vsel %vm128, %v1318, 0.0
    %1321 = vadd.xlane.f32.xlu0 %v1320
    %v1322 = vpop.xlane.xlu0 %1321
    %v1323 = vsel %vm128, %v1319, 0.0
    %1324 = vadd.xlane.f32.xlu0 %v1323
    %v1325 = vpop.xlane.xlu0 %1324
    %v1326 = vmul.f32 %v1322, %v135
    %v1327 = vmul.f32 %v1325, %v135
    %v1328 = vadd.f32 %v1326, 1e-05
    %v1329 = vadd.f32 %v1327, 1e-05
    %v1330 = vrsqrt.pop %v1328
    %v1331 = vrsqrt.pop %v1329
    %v1332 = vmul.f32 %v1316, %v1330
    %v1333 = vmul.f32 %v1317, %v1331
    %v1334 = vlaneseq
    %v1335 = vshrl.u32 %v1334, 7
    %v1336 = vsub.s32 0, %v1335
    %v1337 = vrot.slane %v1306, %v1336
    %v1338 = vmul.f32 %v1332, %v1337
    %v1339 = vmul.f32 %v1333, %v1337
    %v1340 = vlaneseq
    %v1341 = vshrl.u32 %v1340, 7
    %v1342 = vsub.s32 0, %v1341
    %v1343 = vrot.slane %v1307, %v1342
    %v1344 = vadd.f32 %v1338, %v1343
    %v1345 = vadd.f32 %v1339, %v1343
    %v1346 = vmax.f32 %v1344, 0.0
    %v1347 = vmax.f32 %v1345, 0.0
    %v1348 = vld [vmem:[%s2 + $0x18] sm:$0xff]
    %v1349 = vld [vmem:[%s2 + $0x38] sm:$0xff]
    %v1350 = vld [vmem:[%s2 + $0x58] sm:$0xff]
    %v1351 = vld [vmem:[%s2 + $0x78] sm:$0xff]
    %v1352 = vld [vmem:[#allocation2 + $0x15] sm:$0x1]
    %v1353 = vlaneseq
    %v1354 = vshrl.u32 %v1353, 7
    %v1355 = vsub.s32 0, %v1354
    %v1356 = vrot.slane %v1352, %v1355
    %v1358 = vsel %vm128, %v1346, 0
    %v1361 = vsel %vm128, %v1347, 0
    %1363 = vmatprep.subr.mxu0 0.0
    %1364 = vmatpush1.msra.mxu0 %v1348
    %1365 = vmatprep.subr.mxu0 0.0
    %1366 = vmatpush1.msra.mxu0 %v1349
    %1367 = vmatprep.subr.mxu0 0.0
    %1368 = vmatpush1.msra.mxu0 %v1350
    %1369 = vmatprep.subr.mxu0 0.0
    %1370 = vmatpush1.msra.mxu0 %v1351
    %1371 = vmatprep.subr.mxu0 0.0
    %1372 = vmatpush1.msra.mxu0 0.0
    %1373 = vmatprep.subr.mxu0 0.0
    %1374 = vmatpush1.msra.mxu0 0.0
    %1375 = vmatprep.subr.mxu0 0.0
    %1376 = vmatpush1.msra.mxu0 0.0
    %1377 = vmatprep.subr.mxu0 0.0
    %1378 = vmatpush1.msra.mxu0 0.0
    %1379 = vmatprep.subr.mxu0 0.0
    %1380 = vmatpush1.msra.mxu0 0.0
    %1381 = vmatprep.subr.mxu0 0.0
    %1382 = vmatpush1.msra.mxu0 0.0
    %1383 = vmatprep.subr.mxu0 0.0
    %1384 = vmatpush1.msra.mxu0 0.0
    %1385 = vmatprep.subr.mxu0 0.0
    %1386 = vmatpush1.msra.mxu0 0.0
    %1387 = vmatprep.subr.mxu0 0.0
    %1388 = vmatpush1.msra.mxu0 0.0
    %1389 = vmatprep.subr.mxu0 0.0
    %1390 = vmatpush1.msra.mxu0 0.0
    %1391 = vmatprep.subr.mxu0 0.0
    %1392 = vmatpush1.msra.mxu0 0.0
    %1393 = vmatprep.subr.mxu0 0.0
    %1394 = vmatpush1.msra.mxu0 0.0
    %1395 = vmatprep.subr.mxu0 0.0
    %1396 = vmatpush1.msra.mxu0 0.0
    %1397 = vmatprep.subr.mxu0 0.0
    %1398 = vmatpush1.msra.mxu0 0.0
    %1399 = vmatprep.subr.mxu0 0.0
    %1400 = vmatpush1.msra.mxu0 0.0
    %1401 = vmatprep.subr.mxu0 0.0
    %1402 = vmatpush1.msra.mxu0 0.0
    %1403 = vmatprep.subr.mxu0 0.0
    %1404 = vmatpush1.msra.mxu0 0.0
    %1405 = vmatprep.subr.mxu0 0.0
    %1406 = vmatpush1.msra.mxu0 0.0
    %1407 = vmatprep.subr.mxu0 0.0
    %1408 = vmatpush1.msra.mxu0 0.0
    %1409 = vmatprep.subr.mxu0 0.0
    %1410 = vmatpush1.msra.mxu0 0.0
    %1411 = vmatprep.subr.mxu0 0.0
    %1412 = vmatpush1.msra.mxu0 0.0
    %1413 = vmatprep.subr.mxu0 0.0
    %1414 = vmatpush1.msra.mxu0 0.0
    %1415 = vmatprep.subr.mxu0 0.0
    %1416 = vmatpush1.msra.mxu0 0.0
    %1417 = vmatprep.subr.mxu0 0.0
    %1418 = vmatpush1.msra.mxu0 0.0
    %1419 = vmatprep.subr.mxu0 0.0
    %1420 = vmatpush1.msra.mxu0 0.0
    %1421 = vmatprep.subr.mxu0 0.0
    %1422 = vmatpush1.msra.mxu0 0.0
    %1423 = vmatprep.subr.mxu0 0.0
    %1424 = vmatpush1.msra.mxu0 0.0
    %1425 = vmatprep.subr.mxu0 0.0
    %1426 = vmatpush1.msra.mxu0 0.0
    %1427 = vmatprep.mubr.f32.mxu0 0.0
    %1428 = vmatmul.mubr.f32.gmra.mrb[0].mxu0 %v1358
    %v1429 = vpop.f32.mrb[0].mxu0
    %v1430 = vadd.f32 %v1356, %v1429
    %v1431 = vpop.f32.mrb[0].mxu0
    %1432 = vmatprep.mubr.f32.mxu0 0.0
    %1433 = vmatmul.mubr.f32.gmra.mrb[0].mxu0 %v1361
    %v1434 = vpop.f32.mrb[0].mxu0
    %v1435 = vadd.f32 %v1356, %v1434
    %v1436 = vpop.f32.mrb[0].mxu0
    %1437 = vdwg.mxu0
    %v1438 = vld [vmem:[#allocation2 + $0x16] sm:$0x1]
    %v1439 = vld [vmem:[#allocation2 + $0x17] sm:$0x1]
    %v1440 = vsel %vm128, %v1430, 0.0
    %1441 = vadd.xlane.f32.xlu0 %v1440
    %v1442 = vpop.xlane.xlu0 %1441
    %v1443 = vsel %vm128, %v1435, 0.0
    %1444 = vadd.xlane.f32.xlu0 %v1443
    %v1445 = vpop.xlane.xlu0 %1444
    %v1446 = vmul.f32 %v1442, %v135
    %v1447 = vmul.f32 %v1445, %v135
    %v1448 = vsub.f32 %v1430, %v1446
    %v1449 = vsub.f32 %v1435, %v1447
    %v1450 = vmul.f32 %v1448, %v1448
    %v1451 = vmul.f32 %v1449, %v1449
    %v1452 = vsel %vm128, %v1450, 0.0
    %1453 = vadd.xlane.f32.xlu0 %v1452
    %v1454 = vpop.xlane.xlu0 %1453
    %v1455 = vsel %vm128, %v1451, 0.0
    %1456 = vadd.xlane.f32.xlu0 %v1455
    %v1457 = vpop.xlane.xlu0 %1456
    %v1458 = vmul.f32 %v1454, %v135
    %v1459 = vmul.f32 %v1457, %v135
    %v1460 = vadd.f32 %v1458, 1e-05
    %v1461 = vadd.f32 %v1459, 1e-05
    %v1462 = vrsqrt.pop %v1460
    %v1463 = vrsqrt.pop %v1461
    %v1464 = vmul.f32 %v1448, %v1462
    %v1465 = vmul.f32 %v1449, %v1463
    %v1466 = vlaneseq
    %v1467 = vshrl.u32 %v1466, 7
    %v1468 = vsub.s32 0, %v1467
    %v1469 = vrot.slane %v1438, %v1468
    %v1470 = vmul.f32 %v1464, %v1469
    %v1471 = vmul.f32 %v1465, %v1469
    %v1472 = vlaneseq
    %v1473 = vshrl.u32 %v1472, 7
    %v1474 = vsub.s32 0, %v1473
    %v1475 = vrot.slane %v1439, %v1474
    %v1476 = vadd.f32 %v1470, %v1475
    %v1477 = vadd.f32 %v1471, %v1475
    %v1478 = vmax.f32 %v1476, 0.0
    %v1479 = vmax.f32 %v1477, 0.0
    %v1480 = vsel %vm128, %v1478, -inf
    %v1481 = vrot.slane %v1480, 4
    %v1482 = vmax.f32 %v1480, %v1481
    %v1483 = vrot.slane %v1482, 2
    %v1484 = vmax.f32 %v1482, %v1483
    %v1485 = vrot.slane %v1484, 1
    %v1486 = vmax.f32 %v1484, %v1485
    %v1487 = vsel %vm128, %v1479, -inf
    %v1488 = vrot.slane %v1487, 4
    %v1489 = vmax.f32 %v1487, %v1488
    %v1490 = vrot.slane %v1489, 2
    %v1491 = vmax.f32 %v1489, %v1490
    %v1492 = vrot.slane %v1491, 1
    %v1493 = vmax.f32 %v1491, %v1492
    %v1496 = vsel %vm320, %v1493, %v1486
    %1498 = vrot.lane.b32.xlu0 %v1496, 32
    %v1499 = vpop.permute.xlu0 %1498
    %v1501 = vsel %vm128, %v1496, %v1499
    %vm1502 = vcmask 523264
    %v1503 = vsel %vm1502, %v1501, 0.0
    %1504 = vst [vmem:[#allocation5] sm:$0x3] %v1503
    // Predicated region
    $region22: #{tpu_custom_call.1} parent=1 // pred_check
      _
    $region23: #{tpu_custom_call.1} parent=1 // pred_check_branch
      %1506 = sbr.rel (0) target = $region25
    $region24: #{tpu_custom_call.1} parent=1 // pred_region
      %s1508 = ssub.s32 32, 32
      %1509 = vsyncadd [#allocation4], %s1508
      %s1511 = sshll.u32 [#allocation5], 4
      %s1512 = int_to_ptr.vmem [resolvable:$true] %s1511
      %1514 = dma.vmem_to_hbm [thread:$0]  %s1512, 32, %s4, [#allocation4]
    $region25: #{tpu_custom_call.1} parent=1 // pred_fallthru
      _
    // Predicated region
    $region26: #{tpu_custom_call.1} parent=1 // pred_check
      _
    $region27: #{tpu_custom_call.1} parent=1 // pred_check_branch
      %1516 = sbr.rel (0) target = $region29
    $region28: #{tpu_custom_call.1} parent=1 // pred_region
      %1517 = dma.done [#allocation4], 32
    $region29: #{tpu_custom_call.1} parent=1 // pred_fallthru
      _
    %1518 = vsyncpa [#allocation3], 1
    %1519 = vsyncpa [#allocation4], 1

</llo_original>
